<compile_context>
chip_gen: v5e
topology: v5e:2x2
jax: 0.10.0
libtpu: 0.0.40
codegen_flags: <defaults>
</compile_context>

<pallas_src>
import functools

import jax
import jax.numpy as jnp
from jax.experimental import pallas as pl
from jax.experimental.pallas import tpu as pltpu

FEAT = 512          # backbone feature width (arch.fc = Linear(512, 500))
HIDDEN = 500
KSIZE = 3
OUT_LANES = 128     # lane-dense padded head output; true logit is column 0
OUT_SUBLANES = 8    # sublane-dense output tile


def net_kernel(patches_ref, wct_ref, weff_ref, beff_ref, out_ref, pooled_ref):
    """Grid = (batch, spatial_tile).  Accumulates the GAP sum across tiles."""
    t = pl.program_id(1)

    @pl.when(t == 0)
    def _init():
        pooled_ref[...] = jnp.zeros_like(pooled_ref)

    # Conv tile as one lane-dense MXU matmul; the conv bias is pre-folded as an
    # extra contraction row (patch row `kdim` == 1.0, wct column `kdim` == bc).
    conv = jnp.dot(wct_ref[...], patches_ref[0],
                   preferred_element_type=jnp.float32)        # [FEAT, tile_hw] f32
    conv = jnp.maximum(conv, 0.0)                             # ReLU (VPU)

    # Running global-average-pool sum: cross-lane reduce into f32 VMEM scratch.
    pooled_ref[...] += jnp.sum(conv, axis=1, keepdims=True)   # [FEAT, 1]

    @pl.when(t == pl.num_programs(1) - 1)
    def _finalize():
        # Folded fc+ouput head; 1/hw is already folded into weff (wrapper).
        logit = jnp.sum(pooled_ref[...] * weff_ref[...],
                        axis=0, keepdims=True)                # [1, 1]
        out_ref[0] = jnp.broadcast_to(logit + beff_ref[...],
                                      (OUT_SUBLANES, OUT_LANES))


def im2col_3x3_t(x_nchw):
    """NCHW -> [B, 9*C, H*W]: tap-major/channel-minor rows, spatial lane-dense."""
    B, C, H, W = x_nchw.shape
    xp = jnp.pad(x_nchw, ((0, 0), (0, 0), (1, 1), (1, 1)))
    cols = [xp[:, :, dy:dy + H, dx:dx + W]
            for dy in range(KSIZE) for dx in range(KSIZE)]     # each [B, C, H, W]
    pat = jnp.concatenate(cols, axis=1)                        # [B, 9C, H, W]
    return pat.reshape(B, KSIZE * KSIZE * C, H * W)


def _round_up(n, m):
    return ((n + m - 1) // m) * m


def _vmem_capacity_bytes():
    """Per-core VMEM capacity; falls back to the v7x floor (64 MiB)."""
    try:
        cap = int(getattr(pltpu.get_tpu_info(), "vmem_capacity_bytes", 0))
        if cap >= (16 << 20):
            return cap
    except Exception:
        pass
    return 64 << 20


def _pick_tile_hw(hw, cap_cols):
    """Largest multiple-of-128 divisor of hw that is <= cap_cols (else hw)."""
    best = None
    t = 128
    while t <= min(hw, cap_cols):
        if hw % t == 0:
            best = t
        t += 128
    return best if best is not None else hw


def net_forward(inputs, params, *, tile_hw=None):
    x, meta = inputs                     # mirrors `x, meta = inputs`
    # TODO(synk): the meta branch of the original forward references an
    # undefined `cnn_features` (NameError); only n_meta_features=None is done.
    del meta

    B, C, H, W = x.shape
    hw = H * W
    kdim = KSIZE * KSIZE * C
    kp = _round_up(kdim + 1, 8)          # +1 = folded-bias ones row, sublane pad

    # Lane-dense, bias-folded patch tensor: [B, kp, hw] (row kdim == ones).
    pt = im2col_3x3_t(x)                                        # [B, kdim, hw]
    pt = jnp.concatenate([pt, jnp.ones((B, 1, hw), pt.dtype)], axis=1)
    pt = jnp.pad(pt, ((0, 0), (0, kp - (kdim + 1)), (0, 0)))
    pt = pt.astype(jnp.bfloat16)                                # [B, kp, hw]

    # Conv weights transposed with bias as an extra contraction column.
    wct = jnp.concatenate([params["wc"].T, params["bc"].T], axis=1)  # [512, kdim+1]
    wct = jnp.pad(wct, ((0, 0), (0, kp - (kdim + 1)))).astype(jnp.bfloat16)

    # Fold the head: (p@wfc + bfc)@wout + bout == p@(wfc@wout) + (bfc@wout+bout)
    # and fold the GAP's 1/hw into the effective weight.
    weff = (params["wfc"] @ params["wout"]) * (1.0 / float(hw))      # [512, 1]
    beff = params["bfc"] @ params["wout"] + params["bout"]           # [1, 1]

    vmem_cap = _vmem_capacity_bytes()
    vmem_limit = max(32 << 20, min((vmem_cap * 3) // 4, 100 << 20))

    if tile_hw is None:
        # Per spatial column: conv f32 tile + double-buffered bf16 patch rows.
        bytes_per_col = FEAT * 4 + 2 * 2 * kp
        tile_hw = _pick_tile_hw(hw, max(128, (vmem_limit // 2) // bytes_per_col))
    assert hw % tile_hw == 0, (hw, tile_hw)
    num_t = hw // tile_hw

    grid_spec = pltpu.PrefetchScalarGridSpec(
        num_scalar_prefetch=0,
        grid=(B, num_t),
        in_specs=[
            pl.BlockSpec((1, kp, tile_hw), lambda b, t: (b, 0, t)),   # patches (lane-dense)
            pl.BlockSpec((FEAT, kp), lambda b, t: (0, 0)),            # wcT+bias (resident)
            pl.BlockSpec((FEAT, 1), lambda b, t: (0, 0)),             # weff (scaled by 1/hw)
            pl.BlockSpec((1, 1), lambda b, t: (0, 0)),                # beff
        ],
        out_specs=pl.BlockSpec((1, OUT_SUBLANES, OUT_LANES),
                               lambda b, t: (b, 0, 0)),
        scratch_shapes=[pltpu.VMEM((FEAT, 1), jnp.float32)],          # pooled sum
    )

    out_padded = pl.pallas_call(
        net_kernel,
        out_shape=jax.ShapeDtypeStruct((B, OUT_SUBLANES, OUT_LANES), jnp.float32),
        grid_spec=grid_spec,
        compiler_params=pltpu.CompilerParams(
            dimension_semantics=("parallel", "arbitrary"),
            vmem_limit_bytes=int(vmem_limit),
        ),
    )(pt, wct, weff, beff)

    return out_padded[:, 0, :1]                          # [B, 1] logits


def init_params(key, c_in):
    k = jax.random.split(key, 6)
    kdim = KSIZE * KSIZE * c_in
    scale = lambda fan_in: 1.0 / jnp.sqrt(jnp.float32(fan_in))
    return {
        "wc":   jax.random.normal(k[0], (kdim, FEAT), jnp.float32) * scale(kdim),
        "bc":   jax.random.normal(k[1], (1, FEAT), jnp.float32) * 0.01,
        "wfc":  jax.random.normal(k[2], (FEAT, HIDDEN), jnp.float32) * scale(FEAT),
        "bfc":  jax.random.normal(k[3], (1, HIDDEN), jnp.float32) * 0.01,
        "wout": jax.random.normal(k[4], (HIDDEN, 1), jnp.float32) * scale(HIDDEN),
        "bout": jax.random.normal(k[5], (1, 1), jnp.float32) * 0.01,
    }


def net_forward_ref(inputs, params):
    """Plain-JAX reference (mimics the kernel's bf16 conv operands)."""
    x, _ = inputs
    pt = im2col_3x3_t(x).astype(jnp.bfloat16).astype(jnp.float32)    # [B, kdim, hw]
    wc = params["wc"].astype(jnp.bfloat16).astype(jnp.float32)
    bc = params["bc"].astype(jnp.bfloat16).astype(jnp.float32)
    conv = jnp.maximum(jnp.einsum("bkp,kf->bpf", pt, wc) + bc, 0.0)  # [B, hw, 512]
    pooled = jnp.mean(conv, axis=1)                     # [B, 512]
    feats = pooled @ params["wfc"] + params["bfc"]      # [B, 500]
    return feats @ params["wout"] + params["bout"]      # [B, 1]


if __name__ == "__main__":
    key = jax.random.PRNGKey(0)
    kx, kparam = jax.random.split(key)
    B, C, H, W = 2, 3, 16, 16
    x = jax.random.normal(kx, (B, C, H, W), jnp.float32)
    params = init_params(kparam, C)

    inputs = (x, None)     # (image, meta) tuple; meta unused (n_meta_features=None)

    # Default tiling: hw=256 is small -> single spatial tile per batch element.
    y = net_forward(inputs, params)
    jax.block_until_ready(y)

    # Forced 128-column tiles -> grid (B, 2): exercises the pooled-sum path.
    y_tiled = net_forward(inputs, params, tile_hw=128)
    jax.block_until_ready(y_tiled)

    y_ref = net_forward_ref(inputs, params)
    assert y.shape == (B, 1), y.shape
    assert jnp.allclose(y, y_ref, atol=2e-3, rtol=2e-3), (y, y_ref)
    assert jnp.allclose(y_tiled, y_ref, atol=2e-3, rtol=2e-3), (y_tiled, y_ref)
    print("KERNEL_OK")
</pallas_src>

<mosaic_0001>
module attributes {stable_mosaic.version = 11 : i64} {
  func.func @net_kernel(%arg0: i32, %arg1: i32, %arg2: memref<1x32x256xbf16, #tpu.memory_space<vmem>>, %arg3: memref<512x32xbf16, #tpu.memory_space<vmem>>, %arg4: memref<512x1xf32, #tpu.memory_space<vmem>>, %arg5: memref<1x1xf32, #tpu.memory_space<vmem>>, %arg6: memref<1x8x128xf32, #tpu.memory_space<vmem>>, %arg7: memref<512x1xf32, #tpu.memory_space<vmem>>) attributes {dimension_semantics = [#tpu.dimension_semantics<parallel>, #tpu.dimension_semantics<arbitrary>], iteration_bounds = array<i64: 2, 1>, scalar_prefetch = 0 : i64, scratch_operands = 1 : i64, tpu.core_type = #tpu.core_type<tc>, window_params = [{transform_indices = @transform_0, window_bounds = array<i64: 1, 32, 256>}, {pipeline_mode = #tpu.pipeline_mode<synchronous>, transform_indices = @transform_1, window_bounds = array<i64: 512, 32>}, {pipeline_mode = #tpu.pipeline_mode<synchronous>, transform_indices = @transform_2, window_bounds = array<i64: 512, 1>}, {pipeline_mode = #tpu.pipeline_mode<synchronous>, transform_indices = @transform_3, window_bounds = array<i64: 1, 1>}, {transform_indices = @transform_4, window_bounds = array<i64: 1, 8, 128>}]} {
    %c0_i32 = arith.constant 0 : i32
    %0 = arith.cmpi eq, %arg1, %c0_i32 : i32
    %1 = arith.extui %0 : i1 to i32
    %c0_i32_0 = arith.constant 0 : i32
    %2 = arith.cmpi ne, %1, %c0_i32_0 : i32
    scf.if %2 {
      %cst_13 = arith.constant 0.000000e+00 : f32
      %17 = vector.broadcast %cst_13 : f32 to vector<512x1xf32>
      %c0_14 = arith.constant 0 : index
      %c0_15 = arith.constant 0 : index
      %18 = vector.load %arg7[%c0_14, %c0_15] : memref<512x1xf32, #tpu.memory_space<vmem>>, vector<512x1xf32>
      tpu.vector_store %arg7[%c0_14, %c0_15], %17 {strides = array<i32>} : memref<512x1xf32, #tpu.memory_space<vmem>>, vector<512x1xf32>,
    } else {
    }
    %c0 = arith.constant 0 : index
    %c0_1 = arith.constant 0 : index
    %3 = vector.load %arg3[%c0, %c0_1] : memref<512x32xbf16, #tpu.memory_space<vmem>>, vector<512x32xbf16>
    %c0_2 = arith.constant 0 : index
    %c0_3 = arith.constant 0 : index
    %c0_4 = arith.constant 0 : index
    %4 = vector.load %arg2[%c0_2, %c0_3, %c0_4] : memref<1x32x256xbf16, #tpu.memory_space<vmem>>, vector<1x32x256xbf16>
    %5 = vector.shape_cast %4 : vector<1x32x256xbf16> to vector<32x256xbf16>
    %cst = arith.constant dense<0.000000e+00> : vector<512x256xf32>
    %6 = tpu.matmul %3, %5, %cst {dimension_numbers = #tpu.dot_dimension_numbers<[1], [0], [0], [1], [0, 0, 1, 1], [], []>} : vector<512x32xbf16>, vector<32x256xbf16>, vector<512x256xf32> -> vector<512x256xf32>
    %cst_5 = arith.constant 0.000000e+00 : f32
    %7 = vector.broadcast %cst_5 : f32 to vector<512x256xf32>
    %8 = arith.maximumf %6, %7 : vector<512x256xf32>
    %c0_6 = arith.constant 0 : index
    %c0_7 = arith.constant 0 : index
    %9 = vector.load %arg7[%c0_6, %c0_7] : memref<512x1xf32, #tpu.memory_space<vmem>>, vector<512x1xf32>
    %cst_8 = arith.constant dense<0.000000e+00> : vector<512xf32>
    %10 = vector.multi_reduction <add>, %8, %cst_8 [1] : vector<512x256xf32> to vector<512xf32>
    %11 = vector.shape_cast %10 : vector<512xf32> to vector<512x1xf32>
    %12 = arith.addf %9, %11 : vector<512x1xf32>
    %c0_9 = arith.constant 0 : index
    %c0_10 = arith.constant 0 : index
    %13 = vector.load %arg7[%c0_9, %c0_10] : memref<512x1xf32, #tpu.memory_space<vmem>>, vector<512x1xf32>
    tpu.vector_store %arg7[%c0_9, %c0_10], %12 {strides = array<i32>} : memref<512x1xf32, #tpu.memory_space<vmem>>, vector<512x1xf32>,
    %c0_i32_11 = arith.constant 0 : i32
    %14 = arith.cmpi eq, %arg1, %c0_i32_11 : i32
    %15 = arith.extui %14 : i1 to i32
    %c0_i32_12 = arith.constant 0 : i32
    %16 = arith.cmpi ne, %15, %c0_i32_12 : i32
    scf.if %16 {
      %c0_13 = arith.constant 0 : index
      %c0_14 = arith.constant 0 : index
      %17 = vector.load %arg7[%c0_13, %c0_14] : memref<512x1xf32, #tpu.memory_space<vmem>>, vector<512x1xf32>
      %c0_15 = arith.constant 0 : index
      %c0_16 = arith.constant 0 : index
      %18 = vector.load %arg4[%c0_15, %c0_16] : memref<512x1xf32, #tpu.memory_space<vmem>>, vector<512x1xf32>
      %19 = arith.mulf %17, %18 : vector<512x1xf32>
      %cst_17 = arith.constant dense<0.000000e+00> : vector<1xf32>
      %20 = vector.multi_reduction <add>, %19, %cst_17 [0] : vector<512x1xf32> to vector<1xf32>
      %21 = vector.shape_cast %20 : vector<1xf32> to vector<1x1xf32>
      %c0_18 = arith.constant 0 : index
      %c0_19 = arith.constant 0 : index
      %22 = vector.load %arg5[%c0_18, %c0_19] : memref<1x1xf32, #tpu.memory_space<vmem>>, vector<1x1xf32>
      %23 = arith.addf %21, %22 : vector<1x1xf32>
      %24 = vector.shape_cast %23 : vector<1x1xf32> to vector<1x1xf32>
      %25 = vector.broadcast %24 : vector<1x1xf32> to vector<8x128xf32>
      %c0_20 = arith.constant 0 : index
      %c0_21 = arith.constant 0 : index
      %c0_22 = arith.constant 0 : index
      %26 = vector.load %arg6[%c0_20, %c0_21, %c0_22] : memref<1x8x128xf32, #tpu.memory_space<vmem>>, vector<1x8x128xf32>
      %27 = vector.shape_cast %26 : vector<1x8x128xf32> to vector<8x128xf32>
      %28 = vector.shape_cast %25 : vector<8x128xf32> to vector<1x8x128xf32>
      tpu.vector_store %arg6[%c0_20, %c0_21, %c0_22], %28 {strides = array<i32>} : memref<1x8x128xf32, #tpu.memory_space<vmem>>, vector<1x8x128xf32>,
    } else {
    }
    return
  }
  func.func @transform_0(%arg0: i32, %arg1: i32) -> (i32, i32, i32) {
    %c0_i32 = arith.constant 0 : i32
    %c0_i32_0 = arith.constant 0 : i32
    return %arg0, %c0_i32, %arg1 : i32, i32, i32
  }
  func.func @transform_1(%arg0: i32, %arg1: i32) -> (i32, i32) {
    %c0_i32 = arith.constant 0 : i32
    %c0_i32_0 = arith.constant 0 : i32
    %c0_i32_1 = arith.constant 0 : i32
    return %c0_i32, %c0_i32_0 : i32, i32
  }
  func.func @transform_2(%arg0: i32, %arg1: i32) -> (i32, i32) {
    %c0_i32 = arith.constant 0 : i32
    %c0_i32_0 = arith.constant 0 : i32
    %c0_i32_1 = arith.constant 0 : i32
    return %c0_i32, %c0_i32_0 : i32, i32
  }
  func.func @transform_3(%arg0: i32, %arg1: i32) -> (i32, i32) {
    %c0_i32 = arith.constant 0 : i32
    %c0_i32_0 = arith.constant 0 : i32
    %c0_i32_1 = arith.constant 0 : i32
    return %c0_i32, %c0_i32_0 : i32, i32
  }
  func.func @transform_4(%arg0: i32, %arg1: i32) -> (i32, i32, i32) {
    %c0_i32 = arith.constant 0 : i32
    %c0_i32_0 = arith.constant 0 : i32
    %c0_i32_1 = arith.constant 0 : i32
    return %arg0, %c0_i32, %c0_i32_0 : i32, i32, i32
  }
}

</mosaic_0001>

<llo_original>
// kernel: tpu_custom_call.1
$region0: #{tpu_custom_call.1}
  #allocation0 [shape = 'u32[]', space=smem, size = 0x4, offset = 0x4, fixed_abs, tag = 'smem constant byte address 0x4 - core index']
  #allocation1 [shape = 'u32[72,128]{1,0:T(1,128)}', space=vmem, size = 0x9000, scoped, tag = 'internal scratch']
  #allocation2 [shape = 'f32[512,1]{1,0:T(8,128)}', space=vmem, size = 0x40000, scoped, tag = 'scratch operand']
  #allocation3 [shape = 'f32[1,1]{1,0:T(1,128)S(1)}', space=vmem, size = 0x200, scoped, tag = 'scoped memory for tpu_custom_call.1']
  %s0 = inlined_call_operand.vmem [shape: bf16[2,32,256], index: 0, kind: input, shape index: {}]
  %s1 = inlined_call_operand.vmem [shape: bf16[512,32], index: 1, kind: input, shape index: {}]
  %s2 = inlined_call_operand.vmem [shape: f32[512,1], index: 2, kind: input, shape index: {}]
  %s3 = inlined_call_operand.<no memory space> [shape: f32[1,1], index: 3, kind: input, shape index: {}]
  %s4 = inlined_call_operand.hbm [shape: f32[2,8,128], index: 4, kind: output, shape index: {}]
  %s5 = sld [smem:[#allocation0]]
  $region57: #{tpu_custom_call.1} parent=0
    _
  %s7 = ssub.s32 1, %s5
  %s8 = scalar_select 0, %s7, %s5
  %v9 = vstv %s3
  %10 = vst [vmem:[#allocation3] sm:$0x1] %v9
  $region1: #{tpu_custom_call.1} parent=0
    #allocation4 [shape = 'u8[8192]{0}', space=vmem, size = 0x2000, scoped, tag = 'output window, operand 0']
    #allocation5 [shape = 's32[2]{0}', space=sflag, size = 0x8, scoped, tag = 'scoped memory for tpu_custom_call.1']
    %11 = vsyncpa [#allocation5], 0
    %s12 = scalar_lea.sflag [#allocation5], 1
    %13 = vsyncpa %s12, 0
    loop: start=0, step=1, limit=4
    $region2: #{tpu_custom_call.1} parent=1 // loop_pre_header
      _
    $region3: #{tpu_custom_call.1} parent=1 // loop_header
      %s15 = sphi 0, %s19
      %p16 = scmp.ge.s32.totalorder %s15, 4
      %s22 = sphi 0, %s34
      %s23 = sphi 0, %s30
      %s24 = sphi 0, %s22
      %s25 = sphi 0, %s23
      %s26 = sphi 0, %s24
      %s27 = sphi 0, %s25
      %s39 = sphi 0, %s41
      %s42 = sphi 0, %s39
      %s43 = sphi 0, %s42
      %s59 = sphi 0, %s43
      %s63 = sphi 0, %s63
      %s65 = sphi 0, %s63
      %s66 = sphi 0, %s65
      %s80 = sphi 0, %s66
      %s84 = sphi 0, %s84
      %s86 = sphi 0, %s84
      %s87 = sphi 0, %s86
      %s101 = sphi 0, %s87
      %s105 = sphi 0, %s105
      %s107 = sphi 0, %s105
      %s108 = sphi 0, %s107
      %s122 = sphi 0, %s108
      %s128 = sphi 0, %s130
      %s131 = sphi 0, %s128
      %s132 = sphi 0, %s131
      %s148 = sphi 0, %s132
    $region4: #{tpu_custom_call.1} parent=1 // loop_header_branch
      %18 = sbr.rel (%p16) target = $region8
    $region5: #{tpu_custom_call.1} parent=1 // loop_body
      %s20 = ssub.s32 %s15, 1
      %s21 = ssub.s32 %s15, 2
      %s28 = sadd.s32 1, %s23
      %p29 = scmp.ge.s32.totalorder %s28, 1
      %s30 = scalar_select %p29, 0, %s28
      %s31 = sadd.s32 1, %s22
      %s32 = scalar_select %p29, %s31, %s22
      %p33 = scmp.ge.s32.totalorder %s32, 2
      %s34 = scalar_select %p33, 0, %s32
      %s35 = ssub.s32 %s22, %s34
      %s36 = ssub.s32 %s23, %s30
      %s37 = sor.u32 %s35, %s36
      %p38 = scmp.eq.s32.totalorder %s37, 0
      %s40 = sadd.s32 %s39, 1
      %s41 = scalar_select %p38, %s39, %s40
      %p44 = pneg %p38
      %p45 = scmp.eq.s32.totalorder %s15, 1
      %p46 = por %p44, %p45
      %p47 = scmp.ne.s32.totalorder %s39, %s42
      %p48 = scmp.eq.s32.totalorder %s15, 0
      %p49 = por %p47, %p48
      %p50 = scmp.ne.s32.totalorder %s39, %s42
      %p51 = scmp.eq.s32.totalorder %s20, 1
      %p52 = por %p50, %p51
      %p53 = scmp.ne.s32.totalorder %s42, %s43
      %p54 = scmp.eq.s32.totalorder %s20, 0
      %p55 = por %p53, %p54
      %p56 = scmp.ne.s32.totalorder %s42, %s43
      %p57 = scmp.eq.s32.totalorder %s21, 1
      %p58 = por %p56, %p57
      %p60 = scmp.ne.s32.totalorder %s43, %s59
      %p61 = scmp.eq.s32.totalorder %s21, 0
      %p62 = por %p60, %p61
      %s64 = sadd.s32 %s63, 1
      %p67 = scmp.eq.s32.totalorder %s15, 1
      %p68 = scmp.ne.s32.totalorder %s63, %s65
      %p69 = scmp.eq.s32.totalorder %s15, 0
      %p70 = por %p68, %p69
      %p71 = scmp.ne.s32.totalorder %s63, %s65
      %p72 = scmp.eq.s32.totalorder %s20, 1
      %p73 = por %p71, %p72
      %p74 = scmp.ne.s32.totalorder %s65, %s66
      %p75 = scmp.eq.s32.totalorder %s20, 0
      %p76 = por %p74, %p75
      %p77 = scmp.ne.s32.totalorder %s65, %s66
      %p78 = scmp.eq.s32.totalorder %s21, 1
      %p79 = por %p77, %p78
      %p81 = scmp.ne.s32.totalorder %s66, %s80
      %p82 = scmp.eq.s32.totalorder %s21, 0
      %p83 = por %p81, %p82
      %s85 = sadd.s32 %s84, 1
      %p88 = scmp.eq.s32.totalorder %s15, 1
      %p89 = scmp.ne.s32.totalorder %s84, %s86
      %p90 = scmp.eq.s32.totalorder %s15, 0
      %p91 = por %p89, %p90
      %p92 = scmp.ne.s32.totalorder %s84, %s86
      %p93 = scmp.eq.s32.totalorder %s20, 1
      %p94 = por %p92, %p93
      %p95 = scmp.ne.s32.totalorder %s86, %s87
      %p96 = scmp.eq.s32.totalorder %s20, 0
      %p97 = por %p95, %p96
      %p98 = scmp.ne.s32.totalorder %s86, %s87
      %p99 = scmp.eq.s32.totalorder %s21, 1
      %p100 = por %p98, %p99
      %p102 = scmp.ne.s32.totalorder %s87, %s101
      %p103 = scmp.eq.s32.totalorder %s21, 0
      %p104 = por %p102, %p103
      %s106 = sadd.s32 %s105, 1
      %p109 = scmp.eq.s32.totalorder %s15, 1
      %p110 = scmp.ne.s32.totalorder %s105, %s107
      %p111 = scmp.eq.s32.totalorder %s15, 0
      %p112 = por %p110, %p111
      %p113 = scmp.ne.s32.totalorder %s105, %s107
      %p114 = scmp.eq.s32.totalorder %s20, 1
      %p115 = por %p113, %p114
      %p116 = scmp.ne.s32.totalorder %s107, %s108
      %p117 = scmp.eq.s32.totalorder %s20, 0
      %p118 = por %p116, %p117
      %p119 = scmp.ne.s32.totalorder %s107, %s108
      %p120 = scmp.eq.s32.totalorder %s21, 1
      %p121 = por %p119, %p120
      %p123 = scmp.ne.s32.totalorder %s108, %s122
      %p124 = scmp.eq.s32.totalorder %s21, 0
      %p125 = por %p123, %p124
      %s126 = ssub.s32 %s22, %s34
      %p127 = scmp.eq.s32.totalorder %s126, 0
      %s129 = sadd.s32 %s128, 1
      %s130 = scalar_select %p127, %s128, %s129
      %p133 = pneg %p127
      %p134 = scmp.eq.s32.totalorder %s15, 1
      %p135 = por %p133, %p134
      %p136 = scmp.ne.s32.totalorder %s128, %s131
      %p137 = scmp.eq.s32.totalorder %s15, 0
      %p138 = por %p136, %p137
      %p139 = scmp.ne.s32.totalorder %s128, %s131
      %p140 = scmp.eq.s32.totalorder %s20, 1
      %p141 = por %p139, %p140
      %p142 = scmp.ne.s32.totalorder %s131, %s132
      %p143 = scmp.eq.s32.totalorder %s20, 0
      %p144 = por %p142, %p143
      %p145 = scmp.ne.s32.totalorder %s131, %s132
      %p146 = scmp.eq.s32.totalorder %s21, 1
      %p147 = por %p145, %p146
      %p149 = scmp.ne.s32.totalorder %s132, %s148
      %p150 = scmp.eq.s32.totalorder %s21, 0
      %p151 = por %p149, %p150
      %p152 = scmp.le.s32.totalorder 1, %s15
      %p153 = scmp.lt.s32.totalorder %s15, 3
      %p154 = pnand %p152, %p153
      %p155 = pneg %p154
      // Predicated region
      $region9: #{tpu_custom_call.1} parent=5 // pred_check
        _
      $region10: #{tpu_custom_call.1} parent=5 // pred_check_branch
        %157 = sbr.rel (%p154) target = $region12
      $region11: #{tpu_custom_call.1} parent=5 // pred_region
        %s158 = ssub.s32 %s15, 1
        // Predicated region
        $region13: #{tpu_custom_call.1} parent=11 // pred_check
          %p159 = pneg %p76
        $region14: #{tpu_custom_call.1} parent=11 // pred_check_branch
          %161 = sbr.rel (%p159) target = $region16
        $region15: #{tpu_custom_call.1} parent=11 // pred_region
          _
        $region16: #{tpu_custom_call.1} parent=11 // pred_fallthru
          _
        // Predicated region
        $region17: #{tpu_custom_call.1} parent=11 // pred_check
          %p162 = pneg %p97
        $region18: #{tpu_custom_call.1} parent=11 // pred_check_branch
          %164 = sbr.rel (%p162) target = $region20
        $region19: #{tpu_custom_call.1} parent=11 // pred_region
          _
        $region20: #{tpu_custom_call.1} parent=11 // pred_fallthru
          _
        // Predicated region
        $region21: #{tpu_custom_call.1} parent=11 // pred_check
          %p165 = pneg %p118
        $region22: #{tpu_custom_call.1} parent=11 // pred_check_branch
          %167 = sbr.rel (%p165) target = $region24
        $region23: #{tpu_custom_call.1} parent=11 // pred_region
          _
        $region24: #{tpu_custom_call.1} parent=11 // pred_fallthru
          _
      $region12: #{tpu_custom_call.1} parent=5 // pred_fallthru
        _
      %p168 = scmp.lt.s32.totalorder %s15, 2
      // Predicated region
      $region25: #{tpu_custom_call.1} parent=5 // pred_check
        %p169 = pneg %p168
      $region26: #{tpu_custom_call.1} parent=5 // pred_check_branch
        %171 = sbr.rel (%p169) target = $region28
      $region27: #{tpu_custom_call.1} parent=5 // pred_region
        // Predicated region
        $region29: #{tpu_custom_call.1} parent=27 // pred_check
          %p172 = pneg %p49
        $region30: #{tpu_custom_call.1} parent=27 // pred_check_branch
          %174 = sbr.rel (%p172) target = $region32
        $region31: #{tpu_custom_call.1} parent=27 // pred_region
          %s175 = smul.u32 2, %s23
          %p176 = scmp.lt.s32.totalorder %s22, 1
          %s177 = scalar_select %p176, %s22, 1
          %p178 = scmp.lt.s32.totalorder %s175, 1
          %s179 = scalar_select %p178, %s175, 1
          %s180 = smul.addr %s177, 8
          %s181 = sadd.s32 %s179, %s180
          %s182 = smul.addr %s181, 4
          %s183 = scalar_lea.vmem %s0, %s182
          %s184 = smul.u32 2, %s23
        $region32: #{tpu_custom_call.1} parent=27 // pred_fallthru
          _
      $region28: #{tpu_custom_call.1} parent=5 // pred_fallthru
        _
      %p185 = scmp.le.s32.totalorder 1, %s15
      %p186 = scmp.lt.s32.totalorder %s15, 3
      %p187 = pnand %p185, %p186
      %p188 = pneg %p187
      // Predicated region
      $region33: #{tpu_custom_call.1} parent=5 // pred_check
        _
      $region34: #{tpu_custom_call.1} parent=5 // pred_check_branch
        %190 = sbr.rel (%p187) target = $region36
      $region35: #{tpu_custom_call.1} parent=5 // pred_region
        %s191 = ssub.s32 %s15, 1
        %s192 = smul.u32 2, %s25
        %p193 = scmp.lt.s32.totalorder %s24, 1
        %s194 = scalar_select %p193, %s24, 1
        %p195 = scmp.lt.s32.totalorder %s192, 1
        %s196 = scalar_select %p195, %s192, 1
        %s197 = smul.addr %s194, 8
        %s198 = sadd.s32 %s196, %s197
        %s199 = smul.addr %s198, 4
        %s200 = scalar_lea.vmem %s0, %s199
        %p201 = pneg %p55
        %p202 = pneg %p52
        %p203 = pneg %p76
        %p204 = pneg %p73
        %p205 = pneg %p97
        %p206 = pneg %p94
        %p207 = pneg %p118
        %p208 = pneg %p115
        %p209 = pneg %p144
        %p210 = pneg %p141
        %s211 = sand.u32 %s131, 1
        %s212 = scalar_lea.sflag [#allocation5], %s211
        %s213 = sand.u32 %s131, 1
        %s214 = smul.addr %s213, 8
        %s215 = scalar_lea.vmem [#allocation4], %s214
        %s216 = smul.u32 2, %s25
        %p217 = scmp.lt.s32.totalorder %s24, 1
        %s218 = scalar_select %p217, %s24, 1
        %p219 = scmp.lt.s32.totalorder %s216, 1
        %s220 = scalar_select %p219, %s216, 1
        %s221 = smul.addr %s218, 8
        %s222 = sadd.s32 %s220, %s221
        %s223 = smul.addr %s222, 4
        %s224 = scalar_lea.vmem %s0, %s223
        %s225 = smul.u32 2, %s25
        %p227 = scmp.eq.s32.totalorder %s25, 0
        // Predicated region
        $region37: #{tpu_custom_call.1} parent=35 // pred_check
          %p228 = pneg %p227
        $region38: #{tpu_custom_call.1} parent=35 // pred_check_branch
          %230 = sbr.rel (%p228) target = $region40
        $region39: #{tpu_custom_call.1} parent=35 // pred_region
          %vm231 = vcmask 7168
          %232 = vst.msk [vmem:[#allocation2] sm:$0xff] %vm231, 0.0
          %233 = vst.msk [vmem:[#allocation2 + $0x8] sm:$0xff] %vm231, 0.0
          %234 = vst.msk [vmem:[#allocation2 + $0x10] sm:$0xff] %vm231, 0.0
          %235 = vst.msk [vmem:[#allocation2 + $0x18] sm:$0xff] %vm231, 0.0
          %236 = vst.msk [vmem:[#allocation2 + $0x20] sm:$0xff] %vm231, 0.0
          %237 = vst.msk [vmem:[#allocation2 + $0x28] sm:$0xff] %vm231, 0.0
          %238 = vst.msk [vmem:[#allocation2 + $0x30] sm:$0xff] %vm231, 0.0
          %239 = vst.msk [vmem:[#allocation2 + $0x38] sm:$0xff] %vm231, 0.0
          %240 = vst.msk [vmem:[#allocation2 + $0x40] sm:$0xff] %vm231, 0.0
          %241 = vst.msk [vmem:[#allocation2 + $0x48] sm:$0xff] %vm231, 0.0
          %242 = vst.msk [vmem:[#allocation2 + $0x50] sm:$0xff] %vm231, 0.0
          %243 = vst.msk [vmem:[#allocation2 + $0x58] sm:$0xff] %vm231, 0.0
          %244 = vst.msk [vmem:[#allocation2 + $0x60] sm:$0xff] %vm231, 0.0
          %245 = vst.msk [vmem:[#allocation2 + $0x68] sm:$0xff] %vm231, 0.0
          %246 = vst.msk [vmem:[#allocation2 + $0x70] sm:$0xff] %vm231, 0.0
          %247 = vst.msk [vmem:[#allocation2 + $0x78] sm:$0xff] %vm231, 0.0
          %248 = vst.msk [vmem:[#allocation2 + $0x80] sm:$0xff] %vm231, 0.0
          %249 = vst.msk [vmem:[#allocation2 + $0x88] sm:$0xff] %vm231, 0.0
          %250 = vst.msk [vmem:[#allocation2 + $0x90] sm:$0xff] %vm231, 0.0
          %251 = vst.msk [vmem:[#allocation2 + $0x98] sm:$0xff] %vm231, 0.0
          %252 = vst.msk [vmem:[#allocation2 + $0xa0] sm:$0xff] %vm231, 0.0
          %253 = vst.msk [vmem:[#allocation2 + $0xa8] sm:$0xff] %vm231, 0.0
          %254 = vst.msk [vmem:[#allocation2 + $0xb0] sm:$0xff] %vm231, 0.0
          %255 = vst.msk [vmem:[#allocation2 + $0xb8] sm:$0xff] %vm231, 0.0
          %256 = vst.msk [vmem:[#allocation2 + $0xc0] sm:$0xff] %vm231, 0.0
          %257 = vst.msk [vmem:[#allocation2 + $0xc8] sm:$0xff] %vm231, 0.0
          %258 = vst.msk [vmem:[#allocation2 + $0xd0] sm:$0xff] %vm231, 0.0
          %259 = vst.msk [vmem:[#allocation2 + $0xd8] sm:$0xff] %vm231, 0.0
          %260 = vst.msk [vmem:[#allocation2 + $0xe0] sm:$0xff] %vm231, 0.0
          %261 = vst.msk [vmem:[#allocation2 + $0xe8] sm:$0xff] %vm231, 0.0
          %262 = vst.msk [vmem:[#allocation2 + $0xf0] sm:$0xff] %vm231, 0.0
          %263 = vst.msk [vmem:[#allocation2 + $0xf8] sm:$0xff] %vm231, 0.0
          %264 = vst.msk [vmem:[#allocation2 + $0x100] sm:$0xff] %vm231, 0.0
          %265 = vst.msk [vmem:[#allocation2 + $0x108] sm:$0xff] %vm231, 0.0
          %266 = vst.msk [vmem:[#allocation2 + $0x110] sm:$0xff] %vm231, 0.0
          %267 = vst.msk [vmem:[#allocation2 + $0x118] sm:$0xff] %vm231, 0.0
          %268 = vst.msk [vmem:[#allocation2 + $0x120] sm:$0xff] %vm231, 0.0
          %269 = vst.msk [vmem:[#allocation2 + $0x128] sm:$0xff] %vm231, 0.0
          %270 = vst.msk [vmem:[#allocation2 + $0x130] sm:$0xff] %vm231, 0.0
          %271 = vst.msk [vmem:[#allocation2 + $0x138] sm:$0xff] %vm231, 0.0
          %272 = vst.msk [vmem:[#allocation2 + $0x140] sm:$0xff] %vm231, 0.0
          %273 = vst.msk [vmem:[#allocation2 + $0x148] sm:$0xff] %vm231, 0.0
          %274 = vst.msk [vmem:[#allocation2 + $0x150] sm:$0xff] %vm231, 0.0
          %275 = vst.msk [vmem:[#allocation2 + $0x158] sm:$0xff] %vm231, 0.0
          %276 = vst.msk [vmem:[#allocation2 + $0x160] sm:$0xff] %vm231, 0.0
          %277 = vst.msk [vmem:[#allocation2 + $0x168] sm:$0xff] %vm231, 0.0
          %278 = vst.msk [vmem:[#allocation2 + $0x170] sm:$0xff] %vm231, 0.0
          %279 = vst.msk [vmem:[#allocation2 + $0x178] sm:$0xff] %vm231, 0.0
          %280 = vst.msk [vmem:[#allocation2 + $0x180] sm:$0xff] %vm231, 0.0
          %281 = vst.msk [vmem:[#allocation2 + $0x188] sm:$0xff] %vm231, 0.0
          %282 = vst.msk [vmem:[#allocation2 + $0x190] sm:$0xff] %vm231, 0.0
          %283 = vst.msk [vmem:[#allocation2 + $0x198] sm:$0xff] %vm231, 0.0
          %284 = vst.msk [vmem:[#allocation2 + $0x1a0] sm:$0xff] %vm231, 0.0
          %285 = vst.msk [vmem:[#allocation2 + $0x1a8] sm:$0xff] %vm231, 0.0
          %286 = vst.msk [vmem:[#allocation2 + $0x1b0] sm:$0xff] %vm231, 0.0
          %287 = vst.msk [vmem:[#allocation2 + $0x1b8] sm:$0xff] %vm231, 0.0
          %288 = vst.msk [vmem:[#allocation2 + $0x1c0] sm:$0xff] %vm231, 0.0
          %289 = vst.msk [vmem:[#allocation2 + $0x1c8] sm:$0xff] %vm231, 0.0
          %290 = vst.msk [vmem:[#allocation2 + $0x1d0] sm:$0xff] %vm231, 0.0
          %291 = vst.msk [vmem:[#allocation2 + $0x1d8] sm:$0xff] %vm231, 0.0
          %292 = vst.msk [vmem:[#allocation2 + $0x1e0] sm:$0xff] %vm231, 0.0
          %293 = vst.msk [vmem:[#allocation2 + $0x1e8] sm:$0xff] %vm231, 0.0
          %294 = vst.msk [vmem:[#allocation2 + $0x1f0] sm:$0xff] %vm231, 0.0
          %295 = vst.msk [vmem:[#allocation2 + $0x1f8] sm:$0xff] %vm231, 0.0
        $region40: #{tpu_custom_call.1} parent=35 // pred_fallthru
          _
        %v296 = vld [vmem:[%s1] sm:$0xf]
        %v297 = vld [vmem:[%s1 + $0x4] sm:$0xf]
        %v298 = vld [vmem:[%s1 + $0x8] sm:$0xf]
        %v299 = vld [vmem:[%s1 + $0xc] sm:$0xf]
        %v300 = vld [vmem:[%s1 + $0x10] sm:$0xf]
        %v301 = vld [vmem:[%s1 + $0x14] sm:$0xf]
        %v302 = vld [vmem:[%s1 + $0x18] sm:$0xf]
        %v303 = vld [vmem:[%s1 + $0x1c] sm:$0xf]
        %v304 = vld [vmem:[%s1 + $0x20] sm:$0xf]
        %v305 = vld [vmem:[%s1 + $0x24] sm:$0xf]
        %v306 = vld [vmem:[%s1 + $0x28] sm:$0xf]
        %v307 = vld [vmem:[%s1 + $0x2c] sm:$0xf]
        %v308 = vld [vmem:[%s1 + $0x30] sm:$0xf]
        %v309 = vld [vmem:[%s1 + $0x34] sm:$0xf]
        %v310 = vld [vmem:[%s1 + $0x38] sm:$0xf]
        %v311 = vld [vmem:[%s1 + $0x3c] sm:$0xf]
        %v312 = vld [vmem:[%s1 + $0x40] sm:$0xf]
        %v313 = vld [vmem:[%s1 + $0x44] sm:$0xf]
        %v314 = vld [vmem:[%s1 + $0x48] sm:$0xf]
        %v315 = vld [vmem:[%s1 + $0x4c] sm:$0xf]
        %v316 = vld [vmem:[%s1 + $0x50] sm:$0xf]
        %v317 = vld [vmem:[%s1 + $0x54] sm:$0xf]
        %v318 = vld [vmem:[%s1 + $0x58] sm:$0xf]
        %v319 = vld [vmem:[%s1 + $0x5c] sm:$0xf]
        %v320 = vld [vmem:[%s1 + $0x60] sm:$0xf]
        %v321 = vld [vmem:[%s1 + $0x64] sm:$0xf]
        %v322 = vld [vmem:[%s1 + $0x68] sm:$0xf]
        %v323 = vld [vmem:[%s1 + $0x6c] sm:$0xf]
        %v324 = vld [vmem:[%s1 + $0x70] sm:$0xf]
        %v325 = vld [vmem:[%s1 + $0x74] sm:$0xf]
        %v326 = vld [vmem:[%s1 + $0x78] sm:$0xf]
        %v327 = vld [vmem:[%s1 + $0x7c] sm:$0xf]
        %v328 = vld [vmem:[%s1 + $0x80] sm:$0xf]
        %v329 = vld [vmem:[%s1 + $0x84] sm:$0xf]
        %v330 = vld [vmem:[%s1 + $0x88] sm:$0xf]
        %v331 = vld [vmem:[%s1 + $0x8c] sm:$0xf]
        %v332 = vld [vmem:[%s1 + $0x90] sm:$0xf]
        %v333 = vld [vmem:[%s1 + $0x94] sm:$0xf]
        %v334 = vld [vmem:[%s1 + $0x98] sm:$0xf]
        %v335 = vld [vmem:[%s1 + $0x9c] sm:$0xf]
        %v336 = vld [vmem:[%s1 + $0xa0] sm:$0xf]
        %v337 = vld [vmem:[%s1 + $0xa4] sm:$0xf]
        %v338 = vld [vmem:[%s1 + $0xa8] sm:$0xf]
        %v339 = vld [vmem:[%s1 + $0xac] sm:$0xf]
        %v340 = vld [vmem:[%s1 + $0xb0] sm:$0xf]
        %v341 = vld [vmem:[%s1 + $0xb4] sm:$0xf]
        %v342 = vld [vmem:[%s1 + $0xb8] sm:$0xf]
        %v343 = vld [vmem:[%s1 + $0xbc] sm:$0xf]
        %v344 = vld [vmem:[%s1 + $0xc0] sm:$0xf]
        %v345 = vld [vmem:[%s1 + $0xc4] sm:$0xf]
        %v346 = vld [vmem:[%s1 + $0xc8] sm:$0xf]
        %v347 = vld [vmem:[%s1 + $0xcc] sm:$0xf]
        %v348 = vld [vmem:[%s1 + $0xd0] sm:$0xf]
        %v349 = vld [vmem:[%s1 + $0xd4] sm:$0xf]
        %v350 = vld [vmem:[%s1 + $0xd8] sm:$0xf]
        %v351 = vld [vmem:[%s1 + $0xdc] sm:$0xf]
        %v352 = vld [vmem:[%s1 + $0xe0] sm:$0xf]
        %v353 = vld [vmem:[%s1 + $0xe4] sm:$0xf]
        %v354 = vld [vmem:[%s1 + $0xe8] sm:$0xf]
        %v355 = vld [vmem:[%s1 + $0xec] sm:$0xf]
        %v356 = vld [vmem:[%s1 + $0xf0] sm:$0xf]
        %v357 = vld [vmem:[%s1 + $0xf4] sm:$0xf]
        %v358 = vld [vmem:[%s1 + $0xf8] sm:$0xf]
        %v359 = vld [vmem:[%s1 + $0xfc] sm:$0xf]
        %v360 = vld [vmem:[%s224] sm:$0xff]
        %v361 = vld [vmem:[%s224 + $0x8] sm:$0xff]
        %v362 = vld [vmem:[%s224 + $0x10] sm:$0xff]
        %v363 = vld [vmem:[%s224 + $0x18] sm:$0xff]
        %v428 = vunpack.c.l.b16 %v296
        %v429 = vunpack.c.l.b16 %v297
        %v430 = vunpack.c.l.b16 %v298
        %v431 = vunpack.c.l.b16 %v299
        %v432 = vunpack.c.l.b16 %v300
        %v433 = vunpack.c.l.b16 %v301
        %v434 = vunpack.c.l.b16 %v302
        %v435 = vunpack.c.l.b16 %v303
        %v436 = vunpack.c.l.b16 %v304
        %v437 = vunpack.c.l.b16 %v305
        %v438 = vunpack.c.l.b16 %v306
        %v439 = vunpack.c.l.b16 %v307
        %v440 = vunpack.c.l.b16 %v308
        %v441 = vunpack.c.l.b16 %v309
        %v442 = vunpack.c.l.b16 %v310
        %v443 = vunpack.c.l.b16 %v311
        %v444 = vunpack.c.l.b16 %v312
        %v445 = vunpack.c.l.b16 %v313
        %v446 = vunpack.c.l.b16 %v314
        %v447 = vunpack.c.l.b16 %v315
        %v448 = vunpack.c.l.b16 %v316
        %v449 = vunpack.c.l.b16 %v317
        %v450 = vunpack.c.l.b16 %v318
        %v451 = vunpack.c.l.b16 %v319
        %v452 = vunpack.c.l.b16 %v320
        %v453 = vunpack.c.l.b16 %v321
        %v454 = vunpack.c.l.b16 %v322
        %v455 = vunpack.c.l.b16 %v323
        %v456 = vunpack.c.l.b16 %v324
        %v457 = vunpack.c.l.b16 %v325
        %v458 = vunpack.c.l.b16 %v326
        %v459 = vunpack.c.l.b16 %v327
        %v460 = vunpack.c.l.b16 %v328
        %v461 = vunpack.c.l.b16 %v329
        %v462 = vunpack.c.l.b16 %v330
        %v463 = vunpack.c.l.b16 %v331
        %v464 = vunpack.c.l.b16 %v332
        %v465 = vunpack.c.l.b16 %v333
        %v466 = vunpack.c.l.b16 %v334
        %v467 = vunpack.c.l.b16 %v335
        %v468 = vunpack.c.l.b16 %v336
        %v469 = vunpack.c.l.b16 %v337
        %v470 = vunpack.c.l.b16 %v338
        %v471 = vunpack.c.l.b16 %v339
        %v472 = vunpack.c.l.b16 %v340
        %v473 = vunpack.c.l.b16 %v341
        %v474 = vunpack.c.l.b16 %v342
        %v475 = vunpack.c.l.b16 %v343
        %v476 = vunpack.c.l.b16 %v344
        %v477 = vunpack.c.l.b16 %v345
        %v478 = vunpack.c.l.b16 %v346
        %v479 = vunpack.c.l.b16 %v347
        %v480 = vunpack.c.l.b16 %v348
        %v481 = vunpack.c.l.b16 %v349
        %v482 = vunpack.c.l.b16 %v350
        %v483 = vunpack.c.l.b16 %v351
        %v484 = vunpack.c.l.b16 %v352
        %v485 = vunpack.c.l.b16 %v353
        %v486 = vunpack.c.l.b16 %v354
        %v487 = vunpack.c.l.b16 %v355
        %v488 = vunpack.c.l.b16 %v356
        %v489 = vunpack.c.l.b16 %v357
        %v490 = vunpack.c.l.b16 %v358
        %v491 = vunpack.c.l.b16 %v359
        %v492 = vpack.c.b16 %v429, %v428
        %v493 = vpack.c.b16 %v431, %v430
        %v494 = vpack.c.b16 %v433, %v432
        %v495 = vpack.c.b16 %v435, %v434
        %v496 = vpack.c.b16 %v437, %v436
        %v497 = vpack.c.b16 %v439, %v438
        %v498 = vpack.c.b16 %v441, %v440
        %v499 = vpack.c.b16 %v443, %v442
        %v500 = vpack.c.b16 %v445, %v444
        %v501 = vpack.c.b16 %v447, %v446
        %v502 = vpack.c.b16 %v449, %v448
        %v503 = vpack.c.b16 %v451, %v450
        %v504 = vpack.c.b16 %v453, %v452
        %v505 = vpack.c.b16 %v455, %v454
        %v506 = vpack.c.b16 %v457, %v456
        %v507 = vpack.c.b16 %v459, %v458
        %v508 = vpack.c.b16 %v461, %v460
        %v509 = vpack.c.b16 %v463, %v462
        %v510 = vpack.c.b16 %v465, %v464
        %v511 = vpack.c.b16 %v467, %v466
        %v512 = vpack.c.b16 %v469, %v468
        %v513 = vpack.c.b16 %v471, %v470
        %v514 = vpack.c.b16 %v473, %v472
        %v515 = vpack.c.b16 %v475, %v474
        %v516 = vpack.c.b16 %v477, %v476
        %v517 = vpack.c.b16 %v479, %v478
        %v518 = vpack.c.b16 %v481, %v480
        %v519 = vpack.c.b16 %v483, %v482
        %v520 = vpack.c.b16 %v485, %v484
        %v521 = vpack.c.b16 %v487, %v486
        %v522 = vpack.c.b16 %v489, %v488
        %v523 = vpack.c.b16 %v491, %v490
        %v528 = vunpack.c.l.b16 %v360
        %v529 = vunpack.c.h.b16 %v360
        %v530 = vunpack.c.l.b16 %v361
        %v531 = vunpack.c.h.b16 %v361
        %v532 = vunpack.c.l.b16 %v362
        %v533 = vunpack.c.h.b16 %v362
        %v534 = vunpack.c.l.b16 %v363
        %v535 = vunpack.c.h.b16 %v363
        %v536 = vpack.c.b16 %v530, %v528
        %v537 = vpack.c.b16 %v531, %v529
        %v538 = vpack.c.b16 %v534, %v532
        %v539 = vpack.c.b16 %v535, %v533
        %vm544 = vcmask 261120
        %v546 = vsel %vm544, %v492, 0
        %v549 = vsel %vm544, %v493, 0
        %v552 = vsel %vm544, %v494, 0
        %v555 = vsel %vm544, %v495, 0
        %v558 = vsel %vm544, %v496, 0
        %v561 = vsel %vm544, %v497, 0
        %v564 = vsel %vm544, %v498, 0
        %v567 = vsel %vm544, %v499, 0
        %v570 = vsel %vm544, %v500, 0
        %v573 = vsel %vm544, %v501, 0
        %v576 = vsel %vm544, %v502, 0
        %v579 = vsel %vm544, %v503, 0
        %v582 = vsel %vm544, %v504, 0
        %v585 = vsel %vm544, %v505, 0
        %v588 = vsel %vm544, %v506, 0
        %v591 = vsel %vm544, %v507, 0
        %v594 = vsel %vm544, %v508, 0
        %v597 = vsel %vm544, %v509, 0
        %v600 = vsel %vm544, %v510, 0
        %v603 = vsel %vm544, %v511, 0
        %v606 = vsel %vm544, %v512, 0
        %v609 = vsel %vm544, %v513, 0
        %v612 = vsel %vm544, %v514, 0
        %v615 = vsel %vm544, %v515, 0
        %v618 = vsel %vm544, %v516, 0
        %v621 = vsel %vm544, %v517, 0
        %v624 = vsel %vm544, %v518, 0
        %v627 = vsel %vm544, %v519, 0
        %v630 = vsel %vm544, %v520, 0
        %v633 = vsel %vm544, %v521, 0
        %v636 = vsel %vm544, %v522, 0
        %v639 = vsel %vm544, %v523, 0
        %641 = vmatpush.bf16.msra.mxu0 0
        %642 = vmatpush.bf16.msra.mxu0 0
        %643 = vmatpush.bf16.msra.mxu0 0
        %644 = vmatpush.bf16.msra.mxu0 0
        %645 = vmatpush.bf16.msra.mxu0 0
        %646 = vmatpush.bf16.msra.mxu0 0
        %647 = vmatpush.bf16.msra.mxu0 %v538
        %648 = vmatpush.bf16.msra.mxu0 %v536
        %649 = vmatmul.bf16.gmra.mxu0 %v546
        %v650 = vpop.f32.mrf.mxu0
        %v651 = vadd.f32 0.0, %v650
        %v652 = vpop.f32.mrf.mxu0
        %v653 = vadd.f32 0.0, %v652
        %654 = vmatmul.bf16.gmra.mxu0 %v549
        %v655 = vpop.f32.mrf.mxu0
        %v656 = vadd.f32 0.0, %v655
        %v657 = vpop.f32.mrf.mxu0
        %v658 = vadd.f32 0.0, %v657
        %659 = vmatmul.bf16.gmra.mxu0 %v552
        %v660 = vpop.f32.mrf.mxu0
        %v661 = vadd.f32 0.0, %v660
        %v662 = vpop.f32.mrf.mxu0
        %v663 = vadd.f32 0.0, %v662
        %664 = vmatmul.bf16.gmra.mxu0 %v555
        %v665 = vpop.f32.mrf.mxu0
        %v666 = vadd.f32 0.0, %v665
        %v667 = vpop.f32.mrf.mxu0
        %v668 = vadd.f32 0.0, %v667
        %669 = vmatmul.bf16.gmra.mxu0 %v558
        %v670 = vpop.f32.mrf.mxu0
        %v671 = vadd.f32 0.0, %v670
        %v672 = vpop.f32.mrf.mxu0
        %v673 = vadd.f32 0.0, %v672
        %674 = vmatmul.bf16.gmra.mxu0 %v561
        %v675 = vpop.f32.mrf.mxu0
        %v676 = vadd.f32 0.0, %v675
        %v677 = vpop.f32.mrf.mxu0
        %v678 = vadd.f32 0.0, %v677
        %679 = vmatmul.bf16.gmra.mxu0 %v564
        %v680 = vpop.f32.mrf.mxu0
        %v681 = vadd.f32 0.0, %v680
        %v682 = vpop.f32.mrf.mxu0
        %v683 = vadd.f32 0.0, %v682
        %684 = vmatmul.bf16.gmra.mxu0 %v567
        %v685 = vpop.f32.mrf.mxu0
        %v686 = vadd.f32 0.0, %v685
        %v687 = vpop.f32.mrf.mxu0
        %v688 = vadd.f32 0.0, %v687
        %689 = vmatmul.bf16.gmra.mxu0 %v570
        %v690 = vpop.f32.mrf.mxu0
        %v691 = vadd.f32 0.0, %v690
        %v692 = vpop.f32.mrf.mxu0
        %v693 = vadd.f32 0.0, %v692
        %694 = vmatmul.bf16.gmra.mxu0 %v573
        %v695 = vpop.f32.mrf.mxu0
        %v696 = vadd.f32 0.0, %v695
        %v697 = vpop.f32.mrf.mxu0
        %v698 = vadd.f32 0.0, %v697
        %699 = vmatmul.bf16.gmra.mxu0 %v576
        %v700 = vpop.f32.mrf.mxu0
        %v701 = vadd.f32 0.0, %v700
        %v702 = vpop.f32.mrf.mxu0
        %v703 = vadd.f32 0.0, %v702
        %704 = vmatmul.bf16.gmra.mxu0 %v579
        %v705 = vpop.f32.mrf.mxu0
        %v706 = vadd.f32 0.0, %v705
        %v707 = vpop.f32.mrf.mxu0
        %v708 = vadd.f32 0.0, %v707
        %709 = vmatmul.bf16.gmra.mxu0 %v582
        %v710 = vpop.f32.mrf.mxu0
        %v711 = vadd.f32 0.0, %v710
        %v712 = vpop.f32.mrf.mxu0
        %v713 = vadd.f32 0.0, %v712
        %714 = vmatmul.bf16.gmra.mxu0 %v585
        %v715 = vpop.f32.mrf.mxu0
        %v716 = vadd.f32 0.0, %v715
        %v717 = vpop.f32.mrf.mxu0
        %v718 = vadd.f32 0.0, %v717
        %719 = vmatmul.bf16.gmra.mxu0 %v588
        %v720 = vpop.f32.mrf.mxu0
        %v721 = vadd.f32 0.0, %v720
        %v722 = vpop.f32.mrf.mxu0
        %v723 = vadd.f32 0.0, %v722
        %724 = vmatmul.bf16.gmra.mxu0 %v591
        %v725 = vpop.f32.mrf.mxu0
        %v726 = vadd.f32 0.0, %v725
        %v727 = vpop.f32.mrf.mxu0
        %v728 = vadd.f32 0.0, %v727
        %729 = vmatmul.bf16.gmra.mxu0 %v594
        %v730 = vpop.f32.mrf.mxu0
        %v731 = vadd.f32 0.0, %v730
        %v732 = vpop.f32.mrf.mxu0
        %v733 = vadd.f32 0.0, %v732
        %734 = vmatmul.bf16.gmra.mxu0 %v597
        %v735 = vpop.f32.mrf.mxu0
        %v736 = vadd.f32 0.0, %v735
        %v737 = vpop.f32.mrf.mxu0
        %v738 = vadd.f32 0.0, %v737
        %739 = vmatmul.bf16.gmra.mxu0 %v600
        %v740 = vpop.f32.mrf.mxu0
        %v741 = vadd.f32 0.0, %v740
        %v742 = vpop.f32.mrf.mxu0
        %v743 = vadd.f32 0.0, %v742
        %744 = vmatmul.bf16.gmra.mxu0 %v603
        %v745 = vpop.f32.mrf.mxu0
        %v746 = vadd.f32 0.0, %v745
        %v747 = vpop.f32.mrf.mxu0
        %v748 = vadd.f32 0.0, %v747
        %749 = vmatmul.bf16.gmra.mxu0 %v606
        %v750 = vpop.f32.mrf.mxu0
        %v751 = vadd.f32 0.0, %v750
        %v752 = vpop.f32.mrf.mxu0
        %v753 = vadd.f32 0.0, %v752
        %754 = vmatmul.bf16.gmra.mxu0 %v609
        %v755 = vpop.f32.mrf.mxu0
        %v756 = vadd.f32 0.0, %v755
        %v757 = vpop.f32.mrf.mxu0
        %v758 = vadd.f32 0.0, %v757
        %759 = vmatmul.bf16.gmra.mxu0 %v612
        %v760 = vpop.f32.mrf.mxu0
        %v761 = vadd.f32 0.0, %v760
        %v762 = vpop.f32.mrf.mxu0
        %v763 = vadd.f32 0.0, %v762
        %764 = vmatmul.bf16.gmra.mxu0 %v615
        %v765 = vpop.f32.mrf.mxu0
        %v766 = vadd.f32 0.0, %v765
        %v767 = vpop.f32.mrf.mxu0
        %v768 = vadd.f32 0.0, %v767
        %769 = vmatmul.bf16.gmra.mxu0 %v618
        %v770 = vpop.f32.mrf.mxu0
        %v771 = vadd.f32 0.0, %v770
        %v772 = vpop.f32.mrf.mxu0
        %v773 = vadd.f32 0.0, %v772
        %774 = vmatmul.bf16.gmra.mxu0 %v621
        %v775 = vpop.f32.mrf.mxu0
        %v776 = vadd.f32 0.0, %v775
        %v777 = vpop.f32.mrf.mxu0
        %v778 = vadd.f32 0.0, %v777
        %779 = vmatmul.bf16.gmra.mxu0 %v624
        %v780 = vpop.f32.mrf.mxu0
        %v781 = vadd.f32 0.0, %v780
        %v782 = vpop.f32.mrf.mxu0
        %v783 = vadd.f32 0.0, %v782
        %784 = vmatmul.bf16.gmra.mxu0 %v627
        %v785 = vpop.f32.mrf.mxu0
        %v786 = vadd.f32 0.0, %v785
        %v787 = vpop.f32.mrf.mxu0
        %v788 = vadd.f32 0.0, %v787
        %789 = vmatmul.bf16.gmra.mxu0 %v630
        %v790 = vpop.f32.mrf.mxu0
        %v791 = vadd.f32 0.0, %v790
        %v792 = vpop.f32.mrf.mxu0
        %v793 = vadd.f32 0.0, %v792
        %794 = vmatmul.bf16.gmra.mxu0 %v633
        %v795 = vpop.f32.mrf.mxu0
        %v796 = vadd.f32 0.0, %v795
        %v797 = vpop.f32.mrf.mxu0
        %v798 = vadd.f32 0.0, %v797
        %799 = vmatmul.bf16.gmra.mxu0 %v636
        %v800 = vpop.f32.mrf.mxu0
        %v801 = vadd.f32 0.0, %v800
        %v802 = vpop.f32.mrf.mxu0
        %v803 = vadd.f32 0.0, %v802
        %804 = vmatmul.bf16.gmra.mxu0 %v639
        %v805 = vpop.f32.mrf.mxu0
        %v806 = vadd.f32 0.0, %v805
        %v807 = vpop.f32.mrf.mxu0
        %v808 = vadd.f32 0.0, %v807
        %809 = vdwg.mxu0
        %810 = vmatpush.bf16.msra.mxu0 0
        %811 = vmatpush.bf16.msra.mxu0 0
        %812 = vmatpush.bf16.msra.mxu0 0
        %813 = vmatpush.bf16.msra.mxu0 0
        %814 = vmatpush.bf16.msra.mxu0 0
        %815 = vmatpush.bf16.msra.mxu0 0
        %816 = vmatpush.bf16.msra.mxu0 %v539
        %817 = vmatpush.bf16.msra.mxu0 %v537
        %818 = vmatmul.bf16.gmra.mxu0 %v546
        %v819 = vpop.f32.mrf.mxu0
        %v820 = vadd.f32 0.0, %v819
        %v821 = vpop.f32.mrf.mxu0
        %v822 = vadd.f32 0.0, %v821
        %823 = vmatmul.bf16.gmra.mxu0 %v549
        %v824 = vpop.f32.mrf.mxu0
        %v825 = vadd.f32 0.0, %v824
        %v826 = vpop.f32.mrf.mxu0
        %v827 = vadd.f32 0.0, %v826
        %828 = vmatmul.bf16.gmra.mxu0 %v552
        %v829 = vpop.f32.mrf.mxu0
        %v830 = vadd.f32 0.0, %v829
        %v831 = vpop.f32.mrf.mxu0
        %v832 = vadd.f32 0.0, %v831
        %833 = vmatmul.bf16.gmra.mxu0 %v555
        %v834 = vpop.f32.mrf.mxu0
        %v835 = vadd.f32 0.0, %v834
        %v836 = vpop.f32.mrf.mxu0
        %v837 = vadd.f32 0.0, %v836
        %838 = vmatmul.bf16.gmra.mxu0 %v558
        %v839 = vpop.f32.mrf.mxu0
        %v840 = vadd.f32 0.0, %v839
        %v841 = vpop.f32.mrf.mxu0
        %v842 = vadd.f32 0.0, %v841
        %843 = vmatmul.bf16.gmra.mxu0 %v561
        %v844 = vpop.f32.mrf.mxu0
        %v845 = vadd.f32 0.0, %v844
        %v846 = vpop.f32.mrf.mxu0
        %v847 = vadd.f32 0.0, %v846
        %848 = vmatmul.bf16.gmra.mxu0 %v564
        %v849 = vpop.f32.mrf.mxu0
        %v850 = vadd.f32 0.0, %v849
        %v851 = vpop.f32.mrf.mxu0
        %v852 = vadd.f32 0.0, %v851
        %853 = vmatmul.bf16.gmra.mxu0 %v567
        %v854 = vpop.f32.mrf.mxu0
        %v855 = vadd.f32 0.0, %v854
        %v856 = vpop.f32.mrf.mxu0
        %v857 = vadd.f32 0.0, %v856
        %858 = vmatmul.bf16.gmra.mxu0 %v570
        %v859 = vpop.f32.mrf.mxu0
        %v860 = vadd.f32 0.0, %v859
        %v861 = vpop.f32.mrf.mxu0
        %v862 = vadd.f32 0.0, %v861
        %863 = vmatmul.bf16.gmra.mxu0 %v573
        %v864 = vpop.f32.mrf.mxu0
        %v865 = vadd.f32 0.0, %v864
        %v866 = vpop.f32.mrf.mxu0
        %v867 = vadd.f32 0.0, %v866
        %868 = vmatmul.bf16.gmra.mxu0 %v576
        %v869 = vpop.f32.mrf.mxu0
        %v870 = vadd.f32 0.0, %v869
        %v871 = vpop.f32.mrf.mxu0
        %v872 = vadd.f32 0.0, %v871
        %873 = vmatmul.bf16.gmra.mxu0 %v579
        %v874 = vpop.f32.mrf.mxu0
        %v875 = vadd.f32 0.0, %v874
        %v876 = vpop.f32.mrf.mxu0
        %v877 = vadd.f32 0.0, %v876
        %878 = vmatmul.bf16.gmra.mxu0 %v582
        %v879 = vpop.f32.mrf.mxu0
        %v880 = vadd.f32 0.0, %v879
        %v881 = vpop.f32.mrf.mxu0
        %v882 = vadd.f32 0.0, %v881
        %883 = vmatmul.bf16.gmra.mxu0 %v585
        %v884 = vpop.f32.mrf.mxu0
        %v885 = vadd.f32 0.0, %v884
        %v886 = vpop.f32.mrf.mxu0
        %v887 = vadd.f32 0.0, %v886
        %888 = vmatmul.bf16.gmra.mxu0 %v588
        %v889 = vpop.f32.mrf.mxu0
        %v890 = vadd.f32 0.0, %v889
        %v891 = vpop.f32.mrf.mxu0
        %v892 = vadd.f32 0.0, %v891
        %893 = vmatmul.bf16.gmra.mxu0 %v591
        %v894 = vpop.f32.mrf.mxu0
        %v895 = vadd.f32 0.0, %v894
        %v896 = vpop.f32.mrf.mxu0
        %v897 = vadd.f32 0.0, %v896
        %898 = vmatmul.bf16.gmra.mxu0 %v594
        %v899 = vpop.f32.mrf.mxu0
        %v900 = vadd.f32 0.0, %v899
        %v901 = vpop.f32.mrf.mxu0
        %v902 = vadd.f32 0.0, %v901
        %903 = vmatmul.bf16.gmra.mxu0 %v597
        %v904 = vpop.f32.mrf.mxu0
        %v905 = vadd.f32 0.0, %v904
        %v906 = vpop.f32.mrf.mxu0
        %v907 = vadd.f32 0.0, %v906
        %908 = vmatmul.bf16.gmra.mxu0 %v600
        %v909 = vpop.f32.mrf.mxu0
        %v910 = vadd.f32 0.0, %v909
        %v911 = vpop.f32.mrf.mxu0
        %v912 = vadd.f32 0.0, %v911
        %913 = vmatmul.bf16.gmra.mxu0 %v603
        %v914 = vpop.f32.mrf.mxu0
        %v915 = vadd.f32 0.0, %v914
        %v916 = vpop.f32.mrf.mxu0
        %v917 = vadd.f32 0.0, %v916
        %918 = vmatmul.bf16.gmra.mxu0 %v606
        %v919 = vpop.f32.mrf.mxu0
        %v920 = vadd.f32 0.0, %v919
        %v921 = vpop.f32.mrf.mxu0
        %v922 = vadd.f32 0.0, %v921
        %923 = vmatmul.bf16.gmra.mxu0 %v609
        %v924 = vpop.f32.mrf.mxu0
        %v925 = vadd.f32 0.0, %v924
        %v926 = vpop.f32.mrf.mxu0
        %v927 = vadd.f32 0.0, %v926
        %928 = vmatmul.bf16.gmra.mxu0 %v612
        %v929 = vpop.f32.mrf.mxu0
        %v930 = vadd.f32 0.0, %v929
        %v931 = vpop.f32.mrf.mxu0
        %v932 = vadd.f32 0.0, %v931
        %933 = vmatmul.bf16.gmra.mxu0 %v615
        %v934 = vpop.f32.mrf.mxu0
        %v935 = vadd.f32 0.0, %v934
        %v936 = vpop.f32.mrf.mxu0
        %v937 = vadd.f32 0.0, %v936
        %938 = vmatmul.bf16.gmra.mxu0 %v618
        %v939 = vpop.f32.mrf.mxu0
        %v940 = vadd.f32 0.0, %v939
        %v941 = vpop.f32.mrf.mxu0
        %v942 = vadd.f32 0.0, %v941
        %943 = vmatmul.bf16.gmra.mxu0 %v621
        %v944 = vpop.f32.mrf.mxu0
        %v945 = vadd.f32 0.0, %v944
        %v946 = vpop.f32.mrf.mxu0
        %v947 = vadd.f32 0.0, %v946
        %948 = vmatmul.bf16.gmra.mxu0 %v624
        %v949 = vpop.f32.mrf.mxu0
        %v950 = vadd.f32 0.0, %v949
        %v951 = vpop.f32.mrf.mxu0
        %v952 = vadd.f32 0.0, %v951
        %953 = vmatmul.bf16.gmra.mxu0 %v627
        %v954 = vpop.f32.mrf.mxu0
        %v955 = vadd.f32 0.0, %v954
        %v956 = vpop.f32.mrf.mxu0
        %v957 = vadd.f32 0.0, %v956
        %958 = vmatmul.bf16.gmra.mxu0 %v630
        %v959 = vpop.f32.mrf.mxu0
        %v960 = vadd.f32 0.0, %v959
        %v961 = vpop.f32.mrf.mxu0
        %v962 = vadd.f32 0.0, %v961
        %963 = vmatmul.bf16.gmra.mxu0 %v633
        %v964 = vpop.f32.mrf.mxu0
        %v965 = vadd.f32 0.0, %v964
        %v966 = vpop.f32.mrf.mxu0
        %v967 = vadd.f32 0.0, %v966
        %968 = vmatmul.bf16.gmra.mxu0 %v636
        %v969 = vpop.f32.mrf.mxu0
        %v970 = vadd.f32 0.0, %v969
        %v971 = vpop.f32.mrf.mxu0
        %v972 = vadd.f32 0.0, %v971
        %973 = vmatmul.bf16.gmra.mxu0 %v639
        %v974 = vpop.f32.mrf.mxu0
        %v975 = vadd.f32 0.0, %v974
        %v976 = vpop.f32.mrf.mxu0
        %v977 = vadd.f32 0.0, %v976
        %978 = vdwg.mxu0
        %v979 = vmax.f32 %v651, 0.0
        %v980 = vmax.f32 %v820, 0.0
        %v981 = vmax.f32 %v653, 0.0
        %v982 = vmax.f32 %v822, 0.0
        %v983 = vmax.f32 %v656, 0.0
        %v984 = vmax.f32 %v825, 0.0
        %v985 = vmax.f32 %v658, 0.0
        %v986 = vmax.f32 %v827, 0.0
        %v987 = vmax.f32 %v661, 0.0
        %v988 = vmax.f32 %v830, 0.0
        %v989 = vmax.f32 %v663, 0.0
        %v990 = vmax.f32 %v832, 0.0
        %v991 = vmax.f32 %v666, 0.0
        %v992 = vmax.f32 %v835, 0.0
        %v993 = vmax.f32 %v668, 0.0
        %v994 = vmax.f32 %v837, 0.0
        %v995 = vmax.f32 %v671, 0.0
        %v996 = vmax.f32 %v840, 0.0
        %v997 = vmax.f32 %v673, 0.0
        %v998 = vmax.f32 %v842, 0.0
        %v999 = vmax.f32 %v676, 0.0
        %v1000 = vmax.f32 %v845, 0.0
        %v1001 = vmax.f32 %v678, 0.0
        %v1002 = vmax.f32 %v847, 0.0
        %v1003 = vmax.f32 %v681, 0.0
        %v1004 = vmax.f32 %v850, 0.0
        %v1005 = vmax.f32 %v683, 0.0
        %v1006 = vmax.f32 %v852, 0.0
        %v1007 = vmax.f32 %v686, 0.0
        %v1008 = vmax.f32 %v855, 0.0
        %v1009 = vmax.f32 %v688, 0.0
        %v1010 = vmax.f32 %v857, 0.0
        %v1011 = vmax.f32 %v691, 0.0
        %v1012 = vmax.f32 %v860, 0.0
        %v1013 = vmax.f32 %v693, 0.0
        %v1014 = vmax.f32 %v862, 0.0
        %v1015 = vmax.f32 %v696, 0.0
        %v1016 = vmax.f32 %v865, 0.0
        %v1017 = vmax.f32 %v698, 0.0
        %v1018 = vmax.f32 %v867, 0.0
        %v1019 = vmax.f32 %v701, 0.0
        %v1020 = vmax.f32 %v870, 0.0
        %v1021 = vmax.f32 %v703, 0.0
        %v1022 = vmax.f32 %v872, 0.0
        %v1023 = vmax.f32 %v706, 0.0
        %v1024 = vmax.f32 %v875, 0.0
        %v1025 = vmax.f32 %v708, 0.0
        %v1026 = vmax.f32 %v877, 0.0
        %v1027 = vmax.f32 %v711, 0.0
        %v1028 = vmax.f32 %v880, 0.0
        %v1029 = vmax.f32 %v713, 0.0
        %v1030 = vmax.f32 %v882, 0.0
        %v1031 = vmax.f32 %v716, 0.0
        %v1032 = vmax.f32 %v885, 0.0
        %v1033 = vmax.f32 %v718, 0.0
        %v1034 = vmax.f32 %v887, 0.0
        %v1035 = vmax.f32 %v721, 0.0
        %v1036 = vmax.f32 %v890, 0.0
        %v1037 = vmax.f32 %v723, 0.0
        %v1038 = vmax.f32 %v892, 0.0
        %v1039 = vmax.f32 %v726, 0.0
        %v1040 = vmax.f32 %v895, 0.0
        %v1041 = vmax.f32 %v728, 0.0
        %v1042 = vmax.f32 %v897, 0.0
        %v1043 = vmax.f32 %v731, 0.0
        %v1044 = vmax.f32 %v900, 0.0
        %v1045 = vmax.f32 %v733, 0.0
        %v1046 = vmax.f32 %v902, 0.0
        %v1047 = vmax.f32 %v736, 0.0
        %v1048 = vmax.f32 %v905, 0.0
        %v1049 = vmax.f32 %v738, 0.0
        %v1050 = vmax.f32 %v907, 0.0
        %v1051 = vmax.f32 %v741, 0.0
        %v1052 = vmax.f32 %v910, 0.0
        %v1053 = vmax.f32 %v743, 0.0
        %v1054 = vmax.f32 %v912, 0.0
        %v1055 = vmax.f32 %v746, 0.0
        %v1056 = vmax.f32 %v915, 0.0
        %v1057 = vmax.f32 %v748, 0.0
        %v1058 = vmax.f32 %v917, 0.0
        %v1059 = vmax.f32 %v751, 0.0
        %v1060 = vmax.f32 %v920, 0.0
        %v1061 = vmax.f32 %v753, 0.0
        %v1062 = vmax.f32 %v922, 0.0
        %v1063 = vmax.f32 %v756, 0.0
        %v1064 = vmax.f32 %v925, 0.0
        %v1065 = vmax.f32 %v758, 0.0
        %v1066 = vmax.f32 %v927, 0.0
        %v1067 = vmax.f32 %v761, 0.0
        %v1068 = vmax.f32 %v930, 0.0
        %v1069 = vmax.f32 %v763, 0.0
        %v1070 = vmax.f32 %v932, 0.0
        %v1071 = vmax.f32 %v766, 0.0
        %v1072 = vmax.f32 %v935, 0.0
        %v1073 = vmax.f32 %v768, 0.0
        %v1074 = vmax.f32 %v937, 0.0
        %v1075 = vmax.f32 %v771, 0.0
        %v1076 = vmax.f32 %v940, 0.0
        %v1077 = vmax.f32 %v773, 0.0
        %v1078 = vmax.f32 %v942, 0.0
        %v1079 = vmax.f32 %v776, 0.0
        %v1080 = vmax.f32 %v945, 0.0
        %v1081 = vmax.f32 %v778, 0.0
        %v1082 = vmax.f32 %v947, 0.0
        %v1083 = vmax.f32 %v781, 0.0
        %v1084 = vmax.f32 %v950, 0.0
        %v1085 = vmax.f32 %v783, 0.0
        %v1086 = vmax.f32 %v952, 0.0
        %v1087 = vmax.f32 %v786, 0.0
        %v1088 = vmax.f32 %v955, 0.0
        %v1089 = vmax.f32 %v788, 0.0
        %v1090 = vmax.f32 %v957, 0.0
        %v1091 = vmax.f32 %v791, 0.0
        %v1092 = vmax.f32 %v960, 0.0
        %v1093 = vmax.f32 %v793, 0.0
        %v1094 = vmax.f32 %v962, 0.0
        %v1095 = vmax.f32 %v796, 0.0
        %v1096 = vmax.f32 %v965, 0.0
        %v1097 = vmax.f32 %v798, 0.0
        %v1098 = vmax.f32 %v967, 0.0
        %v1099 = vmax.f32 %v801, 0.0
        %v1100 = vmax.f32 %v970, 0.0
        %v1101 = vmax.f32 %v803, 0.0
        %v1102 = vmax.f32 %v972, 0.0
        %v1103 = vmax.f32 %v806, 0.0
        %v1104 = vmax.f32 %v975, 0.0
        %v1105 = vmax.f32 %v808, 0.0
        %v1106 = vmax.f32 %v977, 0.0
        %v1107 = vld [vmem:[#allocation2] sm:$0xff]
        %v1108 = vld [vmem:[#allocation2 + $0x8] sm:$0xff]
        %v1109 = vld [vmem:[#allocation2 + $0x10] sm:$0xff]
        %v1110 = vld [vmem:[#allocation2 + $0x18] sm:$0xff]
        %v1111 = vld [vmem:[#allocation2 + $0x20] sm:$0xff]
        %v1112 = vld [vmem:[#allocation2 + $0x28] sm:$0xff]
        %v1113 = vld [vmem:[#allocation2 + $0x30] sm:$0xff]
        %v1114 = vld [vmem:[#allocation2 + $0x38] sm:$0xff]
        %v1115 = vld [vmem:[#allocation2 + $0x40] sm:$0xff]
        %v1116 = vld [vmem:[#allocation2 + $0x48] sm:$0xff]
        %v1117 = vld [vmem:[#allocation2 + $0x50] sm:$0xff]
        %v1118 = vld [vmem:[#allocation2 + $0x58] sm:$0xff]
        %v1119 = vld [vmem:[#allocation2 + $0x60] sm:$0xff]
        %v1120 = vld [vmem:[#allocation2 + $0x68] sm:$0xff]
        %v1121 = vld [vmem:[#allocation2 + $0x70] sm:$0xff]
        %v1122 = vld [vmem:[#allocation2 + $0x78] sm:$0xff]
        %v1123 = vld [vmem:[#allocation2 + $0x80] sm:$0xff]
        %v1124 = vld [vmem:[#allocation2 + $0x88] sm:$0xff]
        %v1125 = vld [vmem:[#allocation2 + $0x90] sm:$0xff]
        %v1126 = vld [vmem:[#allocation2 + $0x98] sm:$0xff]
        %v1127 = vld [vmem:[#allocation2 + $0xa0] sm:$0xff]
        %v1128 = vld [vmem:[#allocation2 + $0xa8] sm:$0xff]
        %v1129 = vld [vmem:[#allocation2 + $0xb0] sm:$0xff]
        %v1130 = vld [vmem:[#allocation2 + $0xb8] sm:$0xff]
        %v1131 = vld [vmem:[#allocation2 + $0xc0] sm:$0xff]
        %v1132 = vld [vmem:[#allocation2 + $0xc8] sm:$0xff]
        %v1133 = vld [vmem:[#allocation2 + $0xd0] sm:$0xff]
        %v1134 = vld [vmem:[#allocation2 + $0xd8] sm:$0xff]
        %v1135 = vld [vmem:[#allocation2 + $0xe0] sm:$0xff]
        %v1136 = vld [vmem:[#allocation2 + $0xe8] sm:$0xff]
        %v1137 = vld [vmem:[#allocation2 + $0xf0] sm:$0xff]
        %v1138 = vld [vmem:[#allocation2 + $0xf8] sm:$0xff]
        %v1139 = vld [vmem:[#allocation2 + $0x100] sm:$0xff]
        %v1140 = vld [vmem:[#allocation2 + $0x108] sm:$0xff]
        %v1141 = vld [vmem:[#allocation2 + $0x110] sm:$0xff]
        %v1142 = vld [vmem:[#allocation2 + $0x118] sm:$0xff]
        %v1143 = vld [vmem:[#allocation2 + $0x120] sm:$0xff]
        %v1144 = vld [vmem:[#allocation2 + $0x128] sm:$0xff]
        %v1145 = vld [vmem:[#allocation2 + $0x130] sm:$0xff]
        %v1146 = vld [vmem:[#allocation2 + $0x138] sm:$0xff]
        %v1147 = vld [vmem:[#allocation2 + $0x140] sm:$0xff]
        %v1148 = vld [vmem:[#allocation2 + $0x148] sm:$0xff]
        %v1149 = vld [vmem:[#allocation2 + $0x150] sm:$0xff]
        %v1150 = vld [vmem:[#allocation2 + $0x158] sm:$0xff]
        %v1151 = vld [vmem:[#allocation2 + $0x160] sm:$0xff]
        %v1152 = vld [vmem:[#allocation2 + $0x168] sm:$0xff]
        %v1153 = vld [vmem:[#allocation2 + $0x170] sm:$0xff]
        %v1154 = vld [vmem:[#allocation2 + $0x178] sm:$0xff]
        %v1155 = vld [vmem:[#allocation2 + $0x180] sm:$0xff]
        %v1156 = vld [vmem:[#allocation2 + $0x188] sm:$0xff]
        %v1157 = vld [vmem:[#allocation2 + $0x190] sm:$0xff]
        %v1158 = vld [vmem:[#allocation2 + $0x198] sm:$0xff]
        %v1159 = vld [vmem:[#allocation2 + $0x1a0] sm:$0xff]
        %v1160 = vld [vmem:[#allocation2 + $0x1a8] sm:$0xff]
        %v1161 = vld [vmem:[#allocation2 + $0x1b0] sm:$0xff]
        %v1162 = vld [vmem:[#allocation2 + $0x1b8] sm:$0xff]
        %v1163 = vld [vmem:[#allocation2 + $0x1c0] sm:$0xff]
        %v1164 = vld [vmem:[#allocation2 + $0x1c8] sm:$0xff]
        %v1165 = vld [vmem:[#allocation2 + $0x1d0] sm:$0xff]
        %v1166 = vld [vmem:[#allocation2 + $0x1d8] sm:$0xff]
        %v1167 = vld [vmem:[#allocation2 + $0x1e0] sm:$0xff]
        %v1168 = vld [vmem:[#allocation2 + $0x1e8] sm:$0xff]
        %v1169 = vld [vmem:[#allocation2 + $0x1f0] sm:$0xff]
        %v1170 = vld [vmem:[#allocation2 + $0x1f8] sm:$0xff]
        %v1171 = vadd.f32 %v979, %v980
        %1172 = vadd.xlane.f32.xlu0 %v1171
        %v1173 = vpop.xlane.xlu0 %1172
        %v1174 = vadd.f32 %v981, %v982
        %1175 = vadd.xlane.f32.xlu0 %v1174
        %v1176 = vpop.xlane.xlu0 %1175
        %v1177 = vadd.f32 %v983, %v984
        %1178 = vadd.xlane.f32.xlu0 %v1177
        %v1179 = vpop.xlane.xlu0 %1178
        %v1180 = vadd.f32 %v985, %v986
        %1181 = vadd.xlane.f32.xlu0 %v1180
        %v1182 = vpop.xlane.xlu0 %1181
        %v1183 = vadd.f32 %v987, %v988
        %1184 = vadd.xlane.f32.xlu0 %v1183
        %v1185 = vpop.xlane.xlu0 %1184
        %v1186 = vadd.f32 %v989, %v990
        %1187 = vadd.xlane.f32.xlu0 %v1186
        %v1188 = vpop.xlane.xlu0 %1187
        %v1189 = vadd.f32 %v991, %v992
        %1190 = vadd.xlane.f32.xlu0 %v1189
        %v1191 = vpop.xlane.xlu0 %1190
        %v1192 = vadd.f32 %v993, %v994
        %1193 = vadd.xlane.f32.xlu0 %v1192
        %v1194 = vpop.xlane.xlu0 %1193
        %v1195 = vadd.f32 %v995, %v996
        %1196 = vadd.xlane.f32.xlu0 %v1195
        %v1197 = vpop.xlane.xlu0 %1196
        %v1198 = vadd.f32 %v997, %v998
        %1199 = vadd.xlane.f32.xlu0 %v1198
        %v1200 = vpop.xlane.xlu0 %1199
        %v1201 = vadd.f32 %v999, %v1000
        %1202 = vadd.xlane.f32.xlu0 %v1201
        %v1203 = vpop.xlane.xlu0 %1202
        %v1204 = vadd.f32 %v1001, %v1002
        %1205 = vadd.xlane.f32.xlu0 %v1204
        %v1206 = vpop.xlane.xlu0 %1205
        %v1207 = vadd.f32 %v1003, %v1004
        %1208 = vadd.xlane.f32.xlu0 %v1207
        %v1209 = vpop.xlane.xlu0 %1208
        %v1210 = vadd.f32 %v1005, %v1006
        %1211 = vadd.xlane.f32.xlu0 %v1210
        %v1212 = vpop.xlane.xlu0 %1211
        %v1213 = vadd.f32 %v1007, %v1008
        %1214 = vadd.xlane.f32.xlu0 %v1213
        %v1215 = vpop.xlane.xlu0 %1214
        %v1216 = vadd.f32 %v1009, %v1010
        %1217 = vadd.xlane.f32.xlu0 %v1216
        %v1218 = vpop.xlane.xlu0 %1217
        %v1219 = vadd.f32 %v1011, %v1012
        %1220 = vadd.xlane.f32.xlu0 %v1219
        %v1221 = vpop.xlane.xlu0 %1220
        %v1222 = vadd.f32 %v1013, %v1014
        %1223 = vadd.xlane.f32.xlu0 %v1222
        %v1224 = vpop.xlane.xlu0 %1223
        %v1225 = vadd.f32 %v1015, %v1016
        %1226 = vadd.xlane.f32.xlu0 %v1225
        %v1227 = vpop.xlane.xlu0 %1226
        %v1228 = vadd.f32 %v1017, %v1018
        %1229 = vadd.xlane.f32.xlu0 %v1228
        %v1230 = vpop.xlane.xlu0 %1229
        %v1231 = vadd.f32 %v1019, %v1020
        %1232 = vadd.xlane.f32.xlu0 %v1231
        %v1233 = vpop.xlane.xlu0 %1232
        %v1234 = vadd.f32 %v1021, %v1022
        %1235 = vadd.xlane.f32.xlu0 %v1234
        %v1236 = vpop.xlane.xlu0 %1235
        %v1237 = vadd.f32 %v1023, %v1024
        %1238 = vadd.xlane.f32.xlu0 %v1237
        %v1239 = vpop.xlane.xlu0 %1238
        %v1240 = vadd.f32 %v1025, %v1026
        %1241 = vadd.xlane.f32.xlu0 %v1240
        %v1242 = vpop.xlane.xlu0 %1241
        %v1243 = vadd.f32 %v1027, %v1028
        %1244 = vadd.xlane.f32.xlu0 %v1243
        %v1245 = vpop.xlane.xlu0 %1244
        %v1246 = vadd.f32 %v1029, %v1030
        %1247 = vadd.xlane.f32.xlu0 %v1246
        %v1248 = vpop.xlane.xlu0 %1247
        %v1249 = vadd.f32 %v1031, %v1032
        %1250 = vadd.xlane.f32.xlu0 %v1249
        %v1251 = vpop.xlane.xlu0 %1250
        %v1252 = vadd.f32 %v1033, %v1034
        %1253 = vadd.xlane.f32.xlu0 %v1252
        %v1254 = vpop.xlane.xlu0 %1253
        %v1255 = vadd.f32 %v1035, %v1036
        %1256 = vadd.xlane.f32.xlu0 %v1255
        %v1257 = vpop.xlane.xlu0 %1256
        %v1258 = vadd.f32 %v1037, %v1038
        %1259 = vadd.xlane.f32.xlu0 %v1258
        %v1260 = vpop.xlane.xlu0 %1259
        %v1261 = vadd.f32 %v1039, %v1040
        %1262 = vadd.xlane.f32.xlu0 %v1261
        %v1263 = vpop.xlane.xlu0 %1262
        %v1264 = vadd.f32 %v1041, %v1042
        %1265 = vadd.xlane.f32.xlu0 %v1264
        %v1266 = vpop.xlane.xlu0 %1265
        %v1267 = vadd.f32 %v1043, %v1044
        %1268 = vadd.xlane.f32.xlu0 %v1267
        %v1269 = vpop.xlane.xlu0 %1268
        %v1270 = vadd.f32 %v1045, %v1046
        %1271 = vadd.xlane.f32.xlu0 %v1270
        %v1272 = vpop.xlane.xlu0 %1271
        %v1273 = vadd.f32 %v1047, %v1048
        %1274 = vadd.xlane.f32.xlu0 %v1273
        %v1275 = vpop.xlane.xlu0 %1274
        %v1276 = vadd.f32 %v1049, %v1050
        %1277 = vadd.xlane.f32.xlu0 %v1276
        %v1278 = vpop.xlane.xlu0 %1277
        %v1279 = vadd.f32 %v1051, %v1052
        %1280 = vadd.xlane.f32.xlu0 %v1279
        %v1281 = vpop.xlane.xlu0 %1280
        %v1282 = vadd.f32 %v1053, %v1054
        %1283 = vadd.xlane.f32.xlu0 %v1282
        %v1284 = vpop.xlane.xlu0 %1283
        %v1285 = vadd.f32 %v1055, %v1056
        %1286 = vadd.xlane.f32.xlu0 %v1285
        %v1287 = vpop.xlane.xlu0 %1286
        %v1288 = vadd.f32 %v1057, %v1058
        %1289 = vadd.xlane.f32.xlu0 %v1288
        %v1290 = vpop.xlane.xlu0 %1289
        %v1291 = vadd.f32 %v1059, %v1060
        %1292 = vadd.xlane.f32.xlu0 %v1291
        %v1293 = vpop.xlane.xlu0 %1292
        %v1294 = vadd.f32 %v1061, %v1062
        %1295 = vadd.xlane.f32.xlu0 %v1294
        %v1296 = vpop.xlane.xlu0 %1295
        %v1297 = vadd.f32 %v1063, %v1064
        %1298 = vadd.xlane.f32.xlu0 %v1297
        %v1299 = vpop.xlane.xlu0 %1298
        %v1300 = vadd.f32 %v1065, %v1066
        %1301 = vadd.xlane.f32.xlu0 %v1300
        %v1302 = vpop.xlane.xlu0 %1301
        %v1303 = vadd.f32 %v1067, %v1068
        %1304 = vadd.xlane.f32.xlu0 %v1303
        %v1305 = vpop.xlane.xlu0 %1304
        %v1306 = vadd.f32 %v1069, %v1070
        %1307 = vadd.xlane.f32.xlu0 %v1306
        %v1308 = vpop.xlane.xlu0 %1307
        %v1309 = vadd.f32 %v1071, %v1072
        %1310 = vadd.xlane.f32.xlu0 %v1309
        %v1311 = vpop.xlane.xlu0 %1310
        %v1312 = vadd.f32 %v1073, %v1074
        %1313 = vadd.xlane.f32.xlu0 %v1312
        %v1314 = vpop.xlane.xlu0 %1313
        %v1315 = vadd.f32 %v1075, %v1076
        %1316 = vadd.xlane.f32.xlu0 %v1315
        %v1317 = vpop.xlane.xlu0 %1316
        %v1318 = vadd.f32 %v1077, %v1078
        %1319 = vadd.xlane.f32.xlu0 %v1318
        %v1320 = vpop.xlane.xlu0 %1319
        %v1321 = vadd.f32 %v1079, %v1080
        %1322 = vadd.xlane.f32.xlu0 %v1321
        %v1323 = vpop.xlane.xlu0 %1322
        %v1324 = vadd.f32 %v1081, %v1082
        %1325 = vadd.xlane.f32.xlu0 %v1324
        %v1326 = vpop.xlane.xlu0 %1325
        %v1327 = vadd.f32 %v1083, %v1084
        %1328 = vadd.xlane.f32.xlu0 %v1327
        %v1329 = vpop.xlane.xlu0 %1328
        %v1330 = vadd.f32 %v1085, %v1086
        %1331 = vadd.xlane.f32.xlu0 %v1330
        %v1332 = vpop.xlane.xlu0 %1331
        %v1333 = vadd.f32 %v1087, %v1088
        %1334 = vadd.xlane.f32.xlu0 %v1333
        %v1335 = vpop.xlane.xlu0 %1334
        %v1336 = vadd.f32 %v1089, %v1090
        %1337 = vadd.xlane.f32.xlu0 %v1336
        %v1338 = vpop.xlane.xlu0 %1337
        %v1339 = vadd.f32 %v1091, %v1092
        %1340 = vadd.xlane.f32.xlu0 %v1339
        %v1341 = vpop.xlane.xlu0 %1340
        %v1342 = vadd.f32 %v1093, %v1094
        %1343 = vadd.xlane.f32.xlu0 %v1342
        %v1344 = vpop.xlane.xlu0 %1343
        %v1345 = vadd.f32 %v1095, %v1096
        %1346 = vadd.xlane.f32.xlu0 %v1345
        %v1347 = vpop.xlane.xlu0 %1346
        %v1348 = vadd.f32 %v1097, %v1098
        %1349 = vadd.xlane.f32.xlu0 %v1348
        %v1350 = vpop.xlane.xlu0 %1349
        %v1351 = vadd.f32 %v1099, %v1100
        %1352 = vadd.xlane.f32.xlu0 %v1351
        %v1353 = vpop.xlane.xlu0 %1352
        %v1354 = vadd.f32 %v1101, %v1102
        %1355 = vadd.xlane.f32.xlu0 %v1354
        %v1356 = vpop.xlane.xlu0 %1355
        %v1357 = vadd.f32 %v1103, %v1104
        %1358 = vadd.xlane.f32.xlu0 %v1357
        %v1359 = vpop.xlane.xlu0 %1358
        %v1360 = vadd.f32 %v1105, %v1106
        %1361 = vadd.xlane.f32.xlu0 %v1360
        %v1362 = vpop.xlane.xlu0 %1361
        %v1363 = vadd.f32 %v1107, %v1173
        %v1364 = vadd.f32 %v1108, %v1176
        %v1365 = vadd.f32 %v1109, %v1179
        %v1366 = vadd.f32 %v1110, %v1182
        %v1367 = vadd.f32 %v1111, %v1185
        %v1368 = vadd.f32 %v1112, %v1188
        %v1369 = vadd.f32 %v1113, %v1191
        %v1370 = vadd.f32 %v1114, %v1194
        %v1371 = vadd.f32 %v1115, %v1197
        %v1372 = vadd.f32 %v1116, %v1200
        %v1373 = vadd.f32 %v1117, %v1203
        %v1374 = vadd.f32 %v1118, %v1206
        %v1375 = vadd.f32 %v1119, %v1209
        %v1376 = vadd.f32 %v1120, %v1212
        %v1377 = vadd.f32 %v1121, %v1215
        %v1378 = vadd.f32 %v1122, %v1218
        %v1379 = vadd.f32 %v1123, %v1221
        %v1380 = vadd.f32 %v1124, %v1224
        %v1381 = vadd.f32 %v1125, %v1227
        %v1382 = vadd.f32 %v1126, %v1230
        %v1383 = vadd.f32 %v1127, %v1233
        %v1384 = vadd.f32 %v1128, %v1236
        %v1385 = vadd.f32 %v1129, %v1239
        %v1386 = vadd.f32 %v1130, %v1242
        %v1387 = vadd.f32 %v1131, %v1245
        %v1388 = vadd.f32 %v1132, %v1248
        %v1389 = vadd.f32 %v1133, %v1251
        %v1390 = vadd.f32 %v1134, %v1254
        %v1391 = vadd.f32 %v1135, %v1257
        %v1392 = vadd.f32 %v1136, %v1260
        %v1393 = vadd.f32 %v1137, %v1263
        %v1394 = vadd.f32 %v1138, %v1266
        %v1395 = vadd.f32 %v1139, %v1269
        %v1396 = vadd.f32 %v1140, %v1272
        %v1397 = vadd.f32 %v1141, %v1275
        %v1398 = vadd.f32 %v1142, %v1278
        %v1399 = vadd.f32 %v1143, %v1281
        %v1400 = vadd.f32 %v1144, %v1284
        %v1401 = vadd.f32 %v1145, %v1287
        %v1402 = vadd.f32 %v1146, %v1290
        %v1403 = vadd.f32 %v1147, %v1293
        %v1404 = vadd.f32 %v1148, %v1296
        %v1405 = vadd.f32 %v1149, %v1299
        %v1406 = vadd.f32 %v1150, %v1302
        %v1407 = vadd.f32 %v1151, %v1305
        %v1408 = vadd.f32 %v1152, %v1308
        %v1409 = vadd.f32 %v1153, %v1311
        %v1410 = vadd.f32 %v1154, %v1314
        %v1411 = vadd.f32 %v1155, %v1317
        %v1412 = vadd.f32 %v1156, %v1320
        %v1413 = vadd.f32 %v1157, %v1323
        %v1414 = vadd.f32 %v1158, %v1326
        %v1415 = vadd.f32 %v1159, %v1329
        %v1416 = vadd.f32 %v1160, %v1332
        %v1417 = vadd.f32 %v1161, %v1335
        %v1418 = vadd.f32 %v1162, %v1338
        %v1419 = vadd.f32 %v1163, %v1341
        %v1420 = vadd.f32 %v1164, %v1344
        %v1421 = vadd.f32 %v1165, %v1347
        %v1422 = vadd.f32 %v1166, %v1350
        %v1423 = vadd.f32 %v1167, %v1353
        %v1424 = vadd.f32 %v1168, %v1356
        %v1425 = vadd.f32 %v1169, %v1359
        %v1426 = vadd.f32 %v1170, %v1362
        %vm1427 = vcmask 7168
        %1428 = vst.msk [vmem:[#allocation2] sm:$0xff] %vm1427, %v1363
        %1429 = vst.msk [vmem:[#allocation2 + $0x8] sm:$0xff] %vm1427, %v1364
        %1430 = vst.msk [vmem:[#allocation2 + $0x10] sm:$0xff] %vm1427, %v1365
        %1431 = vst.msk [vmem:[#allocation2 + $0x18] sm:$0xff] %vm1427, %v1366
        %1432 = vst.msk [vmem:[#allocation2 + $0x20] sm:$0xff] %vm1427, %v1367
        %1433 = vst.msk [vmem:[#allocation2 + $0x28] sm:$0xff] %vm1427, %v1368
        %1434 = vst.msk [vmem:[#allocation2 + $0x30] sm:$0xff] %vm1427, %v1369
        %1435 = vst.msk [vmem:[#allocation2 + $0x38] sm:$0xff] %vm1427, %v1370
        %1436 = vst.msk [vmem:[#allocation2 + $0x40] sm:$0xff] %vm1427, %v1371
        %1437 = vst.msk [vmem:[#allocation2 + $0x48] sm:$0xff] %vm1427, %v1372
        %1438 = vst.msk [vmem:[#allocation2 + $0x50] sm:$0xff] %vm1427, %v1373
        %1439 = vst.msk [vmem:[#allocation2 + $0x58] sm:$0xff] %vm1427, %v1374
        %1440 = vst.msk [vmem:[#allocation2 + $0x60] sm:$0xff] %vm1427, %v1375
        %1441 = vst.msk [vmem:[#allocation2 + $0x68] sm:$0xff] %vm1427, %v1376
        %1442 = vst.msk [vmem:[#allocation2 + $0x70] sm:$0xff] %vm1427, %v1377
        %1443 = vst.msk [vmem:[#allocation2 + $0x78] sm:$0xff] %vm1427, %v1378
        %1444 = vst.msk [vmem:[#allocation2 + $0x80] sm:$0xff] %vm1427, %v1379
        %1445 = vst.msk [vmem:[#allocation2 + $0x88] sm:$0xff] %vm1427, %v1380
        %1446 = vst.msk [vmem:[#allocation2 + $0x90] sm:$0xff] %vm1427, %v1381
        %1447 = vst.msk [vmem:[#allocation2 + $0x98] sm:$0xff] %vm1427, %v1382
        %1448 = vst.msk [vmem:[#allocation2 + $0xa0] sm:$0xff] %vm1427, %v1383
        %1449 = vst.msk [vmem:[#allocation2 + $0xa8] sm:$0xff] %vm1427, %v1384
        %1450 = vst.msk [vmem:[#allocation2 + $0xb0] sm:$0xff] %vm1427, %v1385
        %1451 = vst.msk [vmem:[#allocation2 + $0xb8] sm:$0xff] %vm1427, %v1386
        %1452 = vst.msk [vmem:[#allocation2 + $0xc0] sm:$0xff] %vm1427, %v1387
        %1453 = vst.msk [vmem:[#allocation2 + $0xc8] sm:$0xff] %vm1427, %v1388
        %1454 = vst.msk [vmem:[#allocation2 + $0xd0] sm:$0xff] %vm1427, %v1389
        %1455 = vst.msk [vmem:[#allocation2 + $0xd8] sm:$0xff] %vm1427, %v1390
        %1456 = vst.msk [vmem:[#allocation2 + $0xe0] sm:$0xff] %vm1427, %v1391
        %1457 = vst.msk [vmem:[#allocation2 + $0xe8] sm:$0xff] %vm1427, %v1392
        %1458 = vst.msk [vmem:[#allocation2 + $0xf0] sm:$0xff] %vm1427, %v1393
        %1459 = vst.msk [vmem:[#allocation2 + $0xf8] sm:$0xff] %vm1427, %v1394
        %1460 = vst.msk [vmem:[#allocation2 + $0x100] sm:$0xff] %vm1427, %v1395
        %1461 = vst.msk [vmem:[#allocation2 + $0x108] sm:$0xff] %vm1427, %v1396
        %1462 = vst.msk [vmem:[#allocation2 + $0x110] sm:$0xff] %vm1427, %v1397
        %1463 = vst.msk [vmem:[#allocation2 + $0x118] sm:$0xff] %vm1427, %v1398
        %1464 = vst.msk [vmem:[#allocation2 + $0x120] sm:$0xff] %vm1427, %v1399
        %1465 = vst.msk [vmem:[#allocation2 + $0x128] sm:$0xff] %vm1427, %v1400
        %1466 = vst.msk [vmem:[#allocation2 + $0x130] sm:$0xff] %vm1427, %v1401
        %1467 = vst.msk [vmem:[#allocation2 + $0x138] sm:$0xff] %vm1427, %v1402
        %1468 = vst.msk [vmem:[#allocation2 + $0x140] sm:$0xff] %vm1427, %v1403
        %1469 = vst.msk [vmem:[#allocation2 + $0x148] sm:$0xff] %vm1427, %v1404
        %1470 = vst.msk [vmem:[#allocation2 + $0x150] sm:$0xff] %vm1427, %v1405
        %1471 = vst.msk [vmem:[#allocation2 + $0x158] sm:$0xff] %vm1427, %v1406
        %1472 = vst.msk [vmem:[#allocation2 + $0x160] sm:$0xff] %vm1427, %v1407
        %1473 = vst.msk [vmem:[#allocation2 + $0x168] sm:$0xff] %vm1427, %v1408
        %1474 = vst.msk [vmem:[#allocation2 + $0x170] sm:$0xff] %vm1427, %v1409
        %1475 = vst.msk [vmem:[#allocation2 + $0x178] sm:$0xff] %vm1427, %v1410
        %1476 = vst.msk [vmem:[#allocation2 + $0x180] sm:$0xff] %vm1427, %v1411
        %1477 = vst.msk [vmem:[#allocation2 + $0x188] sm:$0xff] %vm1427, %v1412
        %1478 = vst.msk [vmem:[#allocation2 + $0x190] sm:$0xff] %vm1427, %v1413
        %1479 = vst.msk [vmem:[#allocation2 + $0x198] sm:$0xff] %vm1427, %v1414
        %1480 = vst.msk [vmem:[#allocation2 + $0x1a0] sm:$0xff] %vm1427, %v1415
        %1481 = vst.msk [vmem:[#allocation2 + $0x1a8] sm:$0xff] %vm1427, %v1416
        %1482 = vst.msk [vmem:[#allocation2 + $0x1b0] sm:$0xff] %vm1427, %v1417
        %1483 = vst.msk [vmem:[#allocation2 + $0x1b8] sm:$0xff] %vm1427, %v1418
        %1484 = vst.msk [vmem:[#allocation2 + $0x1c0] sm:$0xff] %vm1427, %v1419
        %1485 = vst.msk [vmem:[#allocation2 + $0x1c8] sm:$0xff] %vm1427, %v1420
        %1486 = vst.msk [vmem:[#allocation2 + $0x1d0] sm:$0xff] %vm1427, %v1421
        %1487 = vst.msk [vmem:[#allocation2 + $0x1d8] sm:$0xff] %vm1427, %v1422
        %1488 = vst.msk [vmem:[#allocation2 + $0x1e0] sm:$0xff] %vm1427, %v1423
        %1489 = vst.msk [vmem:[#allocation2 + $0x1e8] sm:$0xff] %vm1427, %v1424
        %1490 = vst.msk [vmem:[#allocation2 + $0x1f0] sm:$0xff] %vm1427, %v1425
        %1491 = vst.msk [vmem:[#allocation2 + $0x1f8] sm:$0xff] %vm1427, %v1426
        // Predicated region
        $region41: #{tpu_custom_call.1} parent=35 // pred_check
          %p1492 = pneg %p227
        $region42: #{tpu_custom_call.1} parent=35 // pred_check_branch
          %1494 = sbr.rel (%p1492) target = $region44
        $region43: #{tpu_custom_call.1} parent=35 // pred_region
          %v1495 = vld [vmem:[#allocation2] sm:$0xff]
          %v1496 = vld [vmem:[#allocation2 + $0x8] sm:$0xff]
          %v1497 = vld [vmem:[#allocation2 + $0x10] sm:$0xff]
          %v1498 = vld [vmem:[#allocation2 + $0x18] sm:$0xff]
          %v1499 = vld [vmem:[#allocation2 + $0x20] sm:$0xff]
          %v1500 = vld [vmem:[#allocation2 + $0x28] sm:$0xff]
          %v1501 = vld [vmem:[#allocation2 + $0x30] sm:$0xff]
          %v1502 = vld [vmem:[#allocation2 + $0x38] sm:$0xff]
          %v1503 = vld [vmem:[#allocation2 + $0x40] sm:$0xff]
          %v1504 = vld [vmem:[#allocation2 + $0x48] sm:$0xff]
          %v1505 = vld [vmem:[#allocation2 + $0x50] sm:$0xff]
          %v1506 = vld [vmem:[#allocation2 + $0x58] sm:$0xff]
          %v1507 = vld [vmem:[#allocation2 + $0x60] sm:$0xff]
          %v1508 = vld [vmem:[#allocation2 + $0x68] sm:$0xff]
          %v1509 = vld [vmem:[#allocation2 + $0x70] sm:$0xff]
          %v1510 = vld [vmem:[#allocation2 + $0x78] sm:$0xff]
          %v1511 = vld [vmem:[#allocation2 + $0x80] sm:$0xff]
          %v1512 = vld [vmem:[#allocation2 + $0x88] sm:$0xff]
          %v1513 = vld [vmem:[#allocation2 + $0x90] sm:$0xff]
          %v1514 = vld [vmem:[#allocation2 + $0x98] sm:$0xff]
          %v1515 = vld [vmem:[#allocation2 + $0xa0] sm:$0xff]
          %v1516 = vld [vmem:[#allocation2 + $0xa8] sm:$0xff]
          %v1517 = vld [vmem:[#allocation2 + $0xb0] sm:$0xff]
          %v1518 = vld [vmem:[#allocation2 + $0xb8] sm:$0xff]
          %v1519 = vld [vmem:[#allocation2 + $0xc0] sm:$0xff]
          %v1520 = vld [vmem:[#allocation2 + $0xc8] sm:$0xff]
          %v1521 = vld [vmem:[#allocation2 + $0xd0] sm:$0xff]
          %v1522 = vld [vmem:[#allocation2 + $0xd8] sm:$0xff]
          %v1523 = vld [vmem:[#allocation2 + $0xe0] sm:$0xff]
          %v1524 = vld [vmem:[#allocation2 + $0xe8] sm:$0xff]
          %v1525 = vld [vmem:[#allocation2 + $0xf0] sm:$0xff]
          %v1526 = vld [vmem:[#allocation2 + $0xf8] sm:$0xff]
          %v1527 = vld [vmem:[#allocation2 + $0x100] sm:$0xff]
          %v1528 = vld [vmem:[#allocation2 + $0x108] sm:$0xff]
          %v1529 = vld [vmem:[#allocation2 + $0x110] sm:$0xff]
          %v1530 = vld [vmem:[#allocation2 + $0x118] sm:$0xff]
          %v1531 = vld [vmem:[#allocation2 + $0x120] sm:$0xff]
          %v1532 = vld [vmem:[#allocation2 + $0x128] sm:$0xff]
          %v1533 = vld [vmem:[#allocation2 + $0x130] sm:$0xff]
          %v1534 = vld [vmem:[#allocation2 + $0x138] sm:$0xff]
          %v1535 = vld [vmem:[#allocation2 + $0x140] sm:$0xff]
          %v1536 = vld [vmem:[#allocation2 + $0x148] sm:$0xff]
          %v1537 = vld [vmem:[#allocation2 + $0x150] sm:$0xff]
          %v1538 = vld [vmem:[#allocation2 + $0x158] sm:$0xff]
          %v1539 = vld [vmem:[#allocation2 + $0x160] sm:$0xff]
          %v1540 = vld [vmem:[#allocation2 + $0x168] sm:$0xff]
          %v1541 = vld [vmem:[#allocation2 + $0x170] sm:$0xff]
          %v1542 = vld [vmem:[#allocation2 + $0x178] sm:$0xff]
          %v1543 = vld [vmem:[#allocation2 + $0x180] sm:$0xff]
          %v1544 = vld [vmem:[#allocation2 + $0x188] sm:$0xff]
          %v1545 = vld [vmem:[#allocation2 + $0x190] sm:$0xff]
          %v1546 = vld [vmem:[#allocation2 + $0x198] sm:$0xff]
          %v1547 = vld [vmem:[#allocation2 + $0x1a0] sm:$0xff]
          %v1548 = vld [vmem:[#allocation2 + $0x1a8] sm:$0xff]
          %v1549 = vld [vmem:[#allocation2 + $0x1b0] sm:$0xff]
          %v1550 = vld [vmem:[#allocation2 + $0x1b8] sm:$0xff]
          %v1551 = vld [vmem:[#allocation2 + $0x1c0] sm:$0xff]
          %v1552 = vld [vmem:[#allocation2 + $0x1c8] sm:$0xff]
          %v1553 = vld [vmem:[#allocation2 + $0x1d0] sm:$0xff]
          %v1554 = vld [vmem:[#allocation2 + $0x1d8] sm:$0xff]
          %v1555 = vld [vmem:[#allocation2 + $0x1e0] sm:$0xff]
          %v1556 = vld [vmem:[#allocation2 + $0x1e8] sm:$0xff]
          %v1557 = vld [vmem:[#allocation2 + $0x1f0] sm:$0xff]
          %v1558 = vld [vmem:[#allocation2 + $0x1f8] sm:$0xff]
          %v1559 = vld [vmem:[%s2] sm:$0xff]
          %v1560 = vld [vmem:[%s2 + $0x8] sm:$0xff]
          %v1561 = vld [vmem:[%s2 + $0x10] sm:$0xff]
          %v1562 = vld [vmem:[%s2 + $0x18] sm:$0xff]
          %v1563 = vld [vmem:[%s2 + $0x20] sm:$0xff]
          %v1564 = vld [vmem:[%s2 + $0x28] sm:$0xff]
          %v1565 = vld [vmem:[%s2 + $0x30] sm:$0xff]
          %v1566 = vld [vmem:[%s2 + $0x38] sm:$0xff]
          %v1567 = vld [vmem:[%s2 + $0x40] sm:$0xff]
          %v1568 = vld [vmem:[%s2 + $0x48] sm:$0xff]
          %v1569 = vld [vmem:[%s2 + $0x50] sm:$0xff]
          %v1570 = vld [vmem:[%s2 + $0x58] sm:$0xff]
          %v1571 = vld [vmem:[%s2 + $0x60] sm:$0xff]
          %v1572 = vld [vmem:[%s2 + $0x68] sm:$0xff]
          %v1573 = vld [vmem:[%s2 + $0x70] sm:$0xff]
          %v1574 = vld [vmem:[%s2 + $0x78] sm:$0xff]
          %v1575 = vld [vmem:[%s2 + $0x80] sm:$0xff]
          %v1576 = vld [vmem:[%s2 + $0x88] sm:$0xff]
          %v1577 = vld [vmem:[%s2 + $0x90] sm:$0xff]
          %v1578 = vld [vmem:[%s2 + $0x98] sm:$0xff]
          %v1579 = vld [vmem:[%s2 + $0xa0] sm:$0xff]
          %v1580 = vld [vmem:[%s2 + $0xa8] sm:$0xff]
          %v1581 = vld [vmem:[%s2 + $0xb0] sm:$0xff]
          %v1582 = vld [vmem:[%s2 + $0xb8] sm:$0xff]
          %v1583 = vld [vmem:[%s2 + $0xc0] sm:$0xff]
          %v1584 = vld [vmem:[%s2 + $0xc8] sm:$0xff]
          %v1585 = vld [vmem:[%s2 + $0xd0] sm:$0xff]
          %v1586 = vld [vmem:[%s2 + $0xd8] sm:$0xff]
          %v1587 = vld [vmem:[%s2 + $0xe0] sm:$0xff]
          %v1588 = vld [vmem:[%s2 + $0xe8] sm:$0xff]
          %v1589 = vld [vmem:[%s2 + $0xf0] sm:$0xff]
          %v1590 = vld [vmem:[%s2 + $0xf8] sm:$0xff]
          %v1591 = vld [vmem:[%s2 + $0x100] sm:$0xff]
          %v1592 = vld [vmem:[%s2 + $0x108] sm:$0xff]
          %v1593 = vld [vmem:[%s2 + $0x110] sm:$0xff]
          %v1594 = vld [vmem:[%s2 + $0x118] sm:$0xff]
          %v1595 = vld [vmem:[%s2 + $0x120] sm:$0xff]
          %v1596 = vld [vmem:[%s2 + $0x128] sm:$0xff]
          %v1597 = vld [vmem:[%s2 + $0x130] sm:$0xff]
          %v1598 = vld [vmem:[%s2 + $0x138] sm:$0xff]
          %v1599 = vld [vmem:[%s2 + $0x140] sm:$0xff]
          %v1600 = vld [vmem:[%s2 + $0x148] sm:$0xff]
          %v1601 = vld [vmem:[%s2 + $0x150] sm:$0xff]
          %v1602 = vld [vmem:[%s2 + $0x158] sm:$0xff]
          %v1603 = vld [vmem:[%s2 + $0x160] sm:$0xff]
          %v1604 = vld [vmem:[%s2 + $0x168] sm:$0xff]
          %v1605 = vld [vmem:[%s2 + $0x170] sm:$0xff]
          %v1606 = vld [vmem:[%s2 + $0x178] sm:$0xff]
          %v1607 = vld [vmem:[%s2 + $0x180] sm:$0xff]
          %v1608 = vld [vmem:[%s2 + $0x188] sm:$0xff]
          %v1609 = vld [vmem:[%s2 + $0x190] sm:$0xff]
          %v1610 = vld [vmem:[%s2 + $0x198] sm:$0xff]
          %v1611 = vld [vmem:[%s2 + $0x1a0] sm:$0xff]
          %v1612 = vld [vmem:[%s2 + $0x1a8] sm:$0xff]
          %v1613 = vld [vmem:[%s2 + $0x1b0] sm:$0xff]
          %v1614 = vld [vmem:[%s2 + $0x1b8] sm:$0xff]
          %v1615 = vld [vmem:[%s2 + $0x1c0] sm:$0xff]
          %v1616 = vld [vmem:[%s2 + $0x1c8] sm:$0xff]
          %v1617 = vld [vmem:[%s2 + $0x1d0] sm:$0xff]
          %v1618 = vld [vmem:[%s2 + $0x1d8] sm:$0xff]
          %v1619 = vld [vmem:[%s2 + $0x1e0] sm:$0xff]
          %v1620 = vld [vmem:[%s2 + $0x1e8] sm:$0xff]
          %v1621 = vld [vmem:[%s2 + $0x1f0] sm:$0xff]
          %v1622 = vld [vmem:[%s2 + $0x1f8] sm:$0xff]
          %v1623 = vmul.f32 %v1495, %v1559
          %v1624 = vmul.f32 %v1496, %v1560
          %v1625 = vmul.f32 %v1497, %v1561
          %v1626 = vmul.f32 %v1498, %v1562
          %v1627 = vmul.f32 %v1499, %v1563
          %v1628 = vmul.f32 %v1500, %v1564
          %v1629 = vmul.f32 %v1501, %v1565
          %v1630 = vmul.f32 %v1502, %v1566
          %v1631 = vmul.f32 %v1503, %v1567
          %v1632 = vmul.f32 %v1504, %v1568
          %v1633 = vmul.f32 %v1505, %v1569
          %v1634 = vmul.f32 %v1506, %v1570
          %v1635 = vmul.f32 %v1507, %v1571
          %v1636 = vmul.f32 %v1508, %v1572
          %v1637 = vmul.f32 %v1509, %v1573
          %v1638 = vmul.f32 %v1510, %v1574
          %v1639 = vmul.f32 %v1511, %v1575
          %v1640 = vmul.f32 %v1512, %v1576
          %v1641 = vmul.f32 %v1513, %v1577
          %v1642 = vmul.f32 %v1514, %v1578
          %v1643 = vmul.f32 %v1515, %v1579
          %v1644 = vmul.f32 %v1516, %v1580
          %v1645 = vmul.f32 %v1517, %v1581
          %v1646 = vmul.f32 %v1518, %v1582
          %v1647 = vmul.f32 %v1519, %v1583
          %v1648 = vmul.f32 %v1520, %v1584
          %v1649 = vmul.f32 %v1521, %v1585
          %v1650 = vmul.f32 %v1522, %v1586
          %v1651 = vmul.f32 %v1523, %v1587
          %v1652 = vmul.f32 %v1524, %v1588
          %v1653 = vmul.f32 %v1525, %v1589
          %v1654 = vmul.f32 %v1526, %v1590
          %v1655 = vmul.f32 %v1527, %v1591
          %v1656 = vmul.f32 %v1528, %v1592
          %v1657 = vmul.f32 %v1529, %v1593
          %v1658 = vmul.f32 %v1530, %v1594
          %v1659 = vmul.f32 %v1531, %v1595
          %v1660 = vmul.f32 %v1532, %v1596
          %v1661 = vmul.f32 %v1533, %v1597
          %v1662 = vmul.f32 %v1534, %v1598
          %v1663 = vmul.f32 %v1535, %v1599
          %v1664 = vmul.f32 %v1536, %v1600
          %v1665 = vmul.f32 %v1537, %v1601
          %v1666 = vmul.f32 %v1538, %v1602
          %v1667 = vmul.f32 %v1539, %v1603
          %v1668 = vmul.f32 %v1540, %v1604
          %v1669 = vmul.f32 %v1541, %v1605
          %v1670 = vmul.f32 %v1542, %v1606
          %v1671 = vmul.f32 %v1543, %v1607
          %v1672 = vmul.f32 %v1544, %v1608
          %v1673 = vmul.f32 %v1545, %v1609
          %v1674 = vmul.f32 %v1546, %v1610
          %v1675 = vmul.f32 %v1547, %v1611
          %v1676 = vmul.f32 %v1548, %v1612
          %v1677 = vmul.f32 %v1549, %v1613
          %v1678 = vmul.f32 %v1550, %v1614
          %v1679 = vmul.f32 %v1551, %v1615
          %v1680 = vmul.f32 %v1552, %v1616
          %v1681 = vmul.f32 %v1553, %v1617
          %v1682 = vmul.f32 %v1554, %v1618
          %v1683 = vmul.f32 %v1555, %v1619
          %v1684 = vmul.f32 %v1556, %v1620
          %v1685 = vmul.f32 %v1557, %v1621
          %v1686 = vmul.f32 %v1558, %v1622
          %v1687 = vsel %vm1427, %v1623, 0.0
          %v1688 = vsel %vm1427, %v1624, 0.0
          %v1689 = vadd.f32 %v1687, %v1688
          %v1690 = vsel %vm1427, %v1625, 0.0
          %v1691 = vadd.f32 %v1689, %v1690
          %v1692 = vsel %vm1427, %v1626, 0.0
          %v1693 = vadd.f32 %v1691, %v1692
          %v1694 = vsel %vm1427, %v1627, 0.0
          %v1695 = vadd.f32 %v1693, %v1694
          %v1696 = vsel %vm1427, %v1628, 0.0
          %v1697 = vadd.f32 %v1695, %v1696
          %v1698 = vsel %vm1427, %v1629, 0.0
          %v1699 = vadd.f32 %v1697, %v1698
          %v1700 = vsel %vm1427, %v1630, 0.0
          %v1701 = vadd.f32 %v1699, %v1700
          %v1702 = vsel %vm1427, %v1631, 0.0
          %v1703 = vadd.f32 %v1701, %v1702
          %v1704 = vsel %vm1427, %v1632, 0.0
          %v1705 = vadd.f32 %v1703, %v1704
          %v1706 = vsel %vm1427, %v1633, 0.0
          %v1707 = vadd.f32 %v1705, %v1706
          %v1708 = vsel %vm1427, %v1634, 0.0
          %v1709 = vadd.f32 %v1707, %v1708
          %v1710 = vsel %vm1427, %v1635, 0.0
          %v1711 = vadd.f32 %v1709, %v1710
          %v1712 = vsel %vm1427, %v1636, 0.0
          %v1713 = vadd.f32 %v1711, %v1712
          %v1714 = vsel %vm1427, %v1637, 0.0
          %v1715 = vadd.f32 %v1713, %v1714
          %v1716 = vsel %vm1427, %v1638, 0.0
          %v1717 = vadd.f32 %v1715, %v1716
          %v1718 = vsel %vm1427, %v1639, 0.0
          %v1719 = vadd.f32 %v1717, %v1718
          %v1720 = vsel %vm1427, %v1640, 0.0
          %v1721 = vadd.f32 %v1719, %v1720
          %v1722 = vsel %vm1427, %v1641, 0.0
          %v1723 = vadd.f32 %v1721, %v1722
          %v1724 = vsel %vm1427, %v1642, 0.0
          %v1725 = vadd.f32 %v1723, %v1724
          %v1726 = vsel %vm1427, %v1643, 0.0
          %v1727 = vadd.f32 %v1725, %v1726
          %v1728 = vsel %vm1427, %v1644, 0.0
          %v1729 = vadd.f32 %v1727, %v1728
          %v1730 = vsel %vm1427, %v1645, 0.0
          %v1731 = vadd.f32 %v1729, %v1730
          %v1732 = vsel %vm1427, %v1646, 0.0
          %v1733 = vadd.f32 %v1731, %v1732
          %v1734 = vsel %vm1427, %v1647, 0.0
          %v1735 = vadd.f32 %v1733, %v1734
          %v1736 = vsel %vm1427, %v1648, 0.0
          %v1737 = vadd.f32 %v1735, %v1736
          %v1738 = vsel %vm1427, %v1649, 0.0
          %v1739 = vadd.f32 %v1737, %v1738
          %v1740 = vsel %vm1427, %v1650, 0.0
          %v1741 = vadd.f32 %v1739, %v1740
          %v1742 = vsel %vm1427, %v1651, 0.0
          %v1743 = vadd.f32 %v1741, %v1742
          %v1744 = vsel %vm1427, %v1652, 0.0
          %v1745 = vadd.f32 %v1743, %v1744
          %v1746 = vsel %vm1427, %v1653, 0.0
          %v1747 = vadd.f32 %v1745, %v1746
          %v1748 = vsel %vm1427, %v1654, 0.0
          %v1749 = vadd.f32 %v1747, %v1748
          %v1750 = vsel %vm1427, %v1655, 0.0
          %v1751 = vadd.f32 %v1749, %v1750
          %v1752 = vsel %vm1427, %v1656, 0.0
          %v1753 = vadd.f32 %v1751, %v1752
          %v1754 = vsel %vm1427, %v1657, 0.0
          %v1755 = vadd.f32 %v1753, %v1754
          %v1756 = vsel %vm1427, %v1658, 0.0
          %v1757 = vadd.f32 %v1755, %v1756
          %v1758 = vsel %vm1427, %v1659, 0.0
          %v1759 = vadd.f32 %v1757, %v1758
          %v1760 = vsel %vm1427, %v1660, 0.0
          %v1761 = vadd.f32 %v1759, %v1760
          %v1762 = vsel %vm1427, %v1661, 0.0
          %v1763 = vadd.f32 %v1761, %v1762
          %v1764 = vsel %vm1427, %v1662, 0.0
          %v1765 = vadd.f32 %v1763, %v1764
          %v1766 = vsel %vm1427, %v1663, 0.0
          %v1767 = vadd.f32 %v1765, %v1766
          %v1768 = vsel %vm1427, %v1664, 0.0
          %v1769 = vadd.f32 %v1767, %v1768
          %v1770 = vsel %vm1427, %v1665, 0.0
          %v1771 = vadd.f32 %v1769, %v1770
          %v1772 = vsel %vm1427, %v1666, 0.0
          %v1773 = vadd.f32 %v1771, %v1772
          %v1774 = vsel %vm1427, %v1667, 0.0
          %v1775 = vadd.f32 %v1773, %v1774
          %v1776 = vsel %vm1427, %v1668, 0.0
          %v1777 = vadd.f32 %v1775, %v1776
          %v1778 = vsel %vm1427, %v1669, 0.0
          %v1779 = vadd.f32 %v1777, %v1778
          %v1780 = vsel %vm1427, %v1670, 0.0
          %v1781 = vadd.f32 %v1779, %v1780
          %v1782 = vsel %vm1427, %v1671, 0.0
          %v1783 = vadd.f32 %v1781, %v1782
          %v1784 = vsel %vm1427, %v1672, 0.0
          %v1785 = vadd.f32 %v1783, %v1784
          %v1786 = vsel %vm1427, %v1673, 0.0
          %v1787 = vadd.f32 %v1785, %v1786
          %v1788 = vsel %vm1427, %v1674, 0.0
          %v1789 = vadd.f32 %v1787, %v1788
          %v1790 = vsel %vm1427, %v1675, 0.0
          %v1791 = vadd.f32 %v1789, %v1790
          %v1792 = vsel %vm1427, %v1676, 0.0
          %v1793 = vadd.f32 %v1791, %v1792
          %v1794 = vsel %vm1427, %v1677, 0.0
          %v1795 = vadd.f32 %v1793, %v1794
          %v1796 = vsel %vm1427, %v1678, 0.0
          %v1797 = vadd.f32 %v1795, %v1796
          %v1798 = vsel %vm1427, %v1679, 0.0
          %v1799 = vadd.f32 %v1797, %v1798
          %v1800 = vsel %vm1427, %v1680, 0.0
          %v1801 = vadd.f32 %v1799, %v1800
          %v1802 = vsel %vm1427, %v1681, 0.0
          %v1803 = vadd.f32 %v1801, %v1802
          %v1804 = vsel %vm1427, %v1682, 0.0
          %v1805 = vadd.f32 %v1803, %v1804
          %v1806 = vsel %vm1427, %v1683, 0.0
          %v1807 = vadd.f32 %v1805, %v1806
          %v1808 = vsel %vm1427, %v1684, 0.0
          %v1809 = vadd.f32 %v1807, %v1808
          %v1810 = vsel %vm1427, %v1685, 0.0
          %v1811 = vadd.f32 %v1809, %v1810
          %v1812 = vsel %vm1427, %v1686, 0.0
          %v1813 = vadd.f32 %v1811, %v1812
          %v1814 = vrot.slane %v1813, 4
          %v1815 = vadd.f32 %v1813, %v1814
          %v1816 = vrot.slane %v1815, 2
          %v1817 = vadd.f32 %v1815, %v1816
          %v1818 = vrot.slane %v1817, 1
          %v1819 = vadd.f32 %v1817, %v1818
          %v1820 = vld [vmem:[#allocation3] sm:$0x1]
          %v1821 = vadd.f32 %v1819, %v1820
          %s1823 = vtos %v1821
          %v1824 = vstv %s1823
          %1826 = vst [vmem:[%s215] sm:$0xff] %v1824
        $region44: #{tpu_custom_call.1} parent=35 // pred_fallthru
          _
        %s1827 = sand.u32 %s131, 1
        %s1828 = scalar_lea.sflag [#allocation5], %s1827
        %s1829 = sand.u32 %s131, 1
        %s1830 = smul.addr %s1829, 8
        %s1831 = scalar_lea.vmem [#allocation4], %s1830
        // Predicated region
        $region45: #{tpu_custom_call.1} parent=35 // pred_check
          %p1832 = pneg %p141
        $region46: #{tpu_custom_call.1} parent=35 // pred_check_branch
          %1834 = sbr.rel (%p1832) target = $region48
        $region47: #{tpu_custom_call.1} parent=35 // pred_region
          %1836 = vsyncadd %s1828, 0
          %s1837 = smul.addr %s24, 8
          %s1838 = scalar_lea.hbm %s4, %s1837
          %s1840 = sshll.u32 %s1831, 4
          %s1841 = int_to_ptr.vmem [resolvable:$true] %s1840
          %s1842 = sshll.u32 %s1838, 4
          %s1843 = int_to_ptr.hbm [resolvable:$true] %s1842
          %1845 = dma.vmem_to_hbm [thread:$0]  %s1841, 128, %s1843, %s1828
        $region48: #{tpu_custom_call.1} parent=35 // pred_fallthru
          _
      $region36: #{tpu_custom_call.1} parent=5 // pred_fallthru
        _
      %p1846 = scmp.le.s32.totalorder 2, %s15
      // Predicated region
      $region49: #{tpu_custom_call.1} parent=5 // pred_check
        %p1847 = pneg %p1846
      $region50: #{tpu_custom_call.1} parent=5 // pred_check_branch
        %1849 = sbr.rel (%p1847) target = $region52
      $region51: #{tpu_custom_call.1} parent=5 // pred_region
        %s1850 = ssub.s32 %s15, 2
        // Predicated region
        $region53: #{tpu_custom_call.1} parent=51 // pred_check
          %p1851 = pneg %p147
        $region54: #{tpu_custom_call.1} parent=51 // pred_check_branch
          %1853 = sbr.rel (%p1851) target = $region56
        $region55: #{tpu_custom_call.1} parent=51 // pred_region
          %s1854 = sand.u32 %s132, 1
          %s1855 = scalar_lea.sflag [#allocation5], %s1854
          %s1856 = sand.u32 %s132, 1
          %s1857 = smul.addr %s1856, 8
          %s1858 = scalar_lea.vmem [#allocation4], %s1857
          %1860 = dma.done %s1855, 128
        $region56: #{tpu_custom_call.1} parent=51 // pred_fallthru
          _
      $region52: #{tpu_custom_call.1} parent=5 // pred_fallthru
        _
    $region6: #{tpu_custom_call.1} parent=1 // loop_footer
      %s19 = sadd.s32 1, %s15
    $region7: #{tpu_custom_call.1} parent=1 // loop_footer_branch
      %14 = sbr.rel target = $region3
    $region8: #{tpu_custom_call.1} parent=1 // loop_exit
      _
    %1861 = vsyncpa [#allocation5], 1
    %s1862 = scalar_lea.sflag [#allocation5], 1
    %1863 = vsyncpa %s1862, 1

</llo_original>
